<compile_context>
chip_gen: v5e
topology: v5e:2x2
jax: 0.10.0
libtpu: 0.0.40
codegen_flags: <defaults>
</compile_context>

<pallas_src>
import functools
import math

import jax
import jax.numpy as jnp
from jax import lax
from jax.experimental import pallas as pl
from jax.experimental.pallas import tpu as pltpu

# ---- DQPSA hyper-parameters (from __init__) --------------------------------
HYPER1 = 0.2
HYPER2 = 0.12
HYPER3 = 0.2
N_HEADS = 8
N_LAYERS = 3
ITC_W = 1.0
ITM_W = 1.0
LM_W = 1.0
CL_W = 1.0

# float32 = exact parity with the fp32 PyTorch reference at these test shapes.
# TODO(synk): jnp.bfloat16 for production-scale S/H (multiples of 128).
MATMUL_DTYPE = jnp.float32

FC1_PAD = 128   # pad the 32-wide fc1 hidden to a full lane (zero-padded => exact)
_MIB = 1024 * 1024


def _mm(a, b):
    """MXU matmul with (optionally reduced-precision) operands, f32 accumulation."""
    return jnp.dot(a.astype(MATMUL_DTYPE), b.astype(MATMUL_DTYPE),
                   preferred_element_type=jnp.float32)


def _vmem_limit_bytes(working_set_bytes):
    """Per-generation scoped-VMEM limit: 2x the estimated working set, clamped
    to the physical budget minus compiler-scratch headroom (64 MiB/TC on v7x,
    128 MiB on v5e/v6e)."""
    try:
        kind = jax.devices()[0].device_kind.lower()
    except Exception:
        kind = ""
    phys = 128 * _MIB if ("v5" in kind or "v6" in kind) else 64 * _MIB
    want = max(2 * working_set_bytes, 32 * _MIB)
    return int(min(want, phys - 16 * _MIB))


# =============================================================================
# Kernel 1: attention adjacency + 3 gated-GCN layers + fc1/fc2 projections
# =============================================================================
def _fused_gcn_kernel(x_ref, mask_ref, adj_dep_ref,
                      wq_ref, bq_ref, wk_ref, bk_ref,
                      wsem0_ref, bsem0_ref, wdep0_ref, bdep0_ref,
                      wsem12_ref, bsem12_ref, wdep12_ref, bdep12_ref,
                      wfc3_ref, bfc3_ref, wfc4_ref, bfc4_ref,
                      w1_ref, b1_ref, w2_ref, b2_ref,
                      h1_ref, h2_ref, *, n_heads, n_layers):
    x = x_ref[0]                                    # (S, H) f32
    mask_row = mask_ref[0].astype(jnp.float32)      # (1, S) in {0,1}
    adj_dep = adj_dep_ref[0].astype(MATMUL_DTYPE)   # (S, S)
    S, H = x.shape
    dk = H // n_heads
    scale = 1.0 / math.sqrt(dk)

    # ---- multi-head attention -> head-averaged adjacency -------------------
    q = _mm(x, wq_ref[...]) + bq_ref[0]             # (S, H)
    k = _mm(x, wk_ref[...]) + bk_ref[0]
    # Stack heads on a leading (major) axis: one batched MXU contraction and
    # one batched softmax instead of n_heads small pushes / softmaxes.
    qh = jnp.stack([q[:, h * dk:(h + 1) * dk] for h in range(n_heads)], axis=0)
    kh = jnp.stack([k[:, h * dk:(h + 1) * dk] for h in range(n_heads)], axis=0)
    scores = jnp.einsum('hqd,hkd->hqk',
                        qh.astype(MATMUL_DTYPE), kh.astype(MATMUL_DTYPE),
                        preferred_element_type=jnp.float32) * scale
    # masked_fill(mask == 0, -10000) on the key/column axis (reference order).
    scores = jnp.where(mask_row[:, None, :] == 0.0, jnp.float32(-10000.0), scores)
    p_attn = jax.nn.softmax(scores, axis=-1)        # (n_heads, S, S)
    adj_ag = jnp.mean(p_attn, axis=0)               # (S, S)

    # adj -= diag(diag(adj)); adj += I; adj = row_mask * adj   (reference order)
    r_iota = lax.broadcasted_iota(jnp.int32, (S, 1), 0)
    c_iota = lax.broadcasted_iota(jnp.int32, (1, S), 1)
    adj_ag = jnp.where(r_iota == c_iota, 1.0, adj_ag)
    adj_ag = adj_ag * jnp.transpose(mask_row)       # (S, 1) row mask

    adj_ag_c = adj_ag.astype(MATMUL_DTYPE)          # resident for all layers

    # ---- gated GCN stack (all layers in-VMEM) -------------------------------
    H_l = x
    I_sem = None
    for l in range(n_layers):
        if l == 0:
            wsem, bsem = wsem0_ref[...], bsem0_ref[0]
            wdep, bdep = wdep0_ref[...], bdep0_ref[0]
        else:
            wsem, bsem = wsem12_ref[l - 1], bsem12_ref[l - 1]
            wdep, bdep = wdep12_ref[l - 1], bdep12_ref[l - 1]

        # reassociated: adj @ (H @ W) instead of (adj @ H) @ W -- at layer 0
        # din = 2*mem so this saves ~S^2*mem MACs per adjacency (exact math).
        HW_sem = _mm(H_l, wsem)                      # (S, mem)
        HW_dep = _mm(H_l, wdep)
        I_sem = _mm(adj_ag_c, HW_sem) + bsem
        I_dep = _mm(adj_dep, HW_dep) + bdep

        g = jax.nn.sigmoid(I_dep)
        I_dep_g = HYPER1 * g
        I_com = (1.0 - I_dep_g) * I_sem + I_dep_g * I_dep
        H_out = jnp.maximum(_mm(I_com, wfc3_ref[...]) + bfc3_ref[0], 0.0)

        if l == 0:
            H_l = _mm(H_l, wfc4_ref[...]) + bfc4_ref[0]
        g_l = jax.nn.sigmoid(H_l)
        H_l = g_l * H_out + (1.0 - g_l) * H_l

    # ---- shared projection fc2(elu(fc1(.))) of H_l and last-layer I_sem -----
    def proj(z):
        hp = _mm(z, w1_ref[...]) + b1_ref[0]
        neg = jnp.exp(jnp.minimum(hp, 0.0)) - 1.0    # ELU(alpha=1), overflow-safe
        hp = jnp.where(hp > 0.0, hp, neg)
        return _mm(hp, w2_ref[...]) + b2_ref[0]

    h1_ref[0] = proj(H_l)
    h2_ref[0] = proj(I_sem)


def fused_gcn_projection(params, x, mask_b1s, adj_dep):
    B, S, H = x.shape
    mem = H // 2

    # zero-pad fc1/fc2 hidden (32) to a full 128-lane block (exact: ELU(0)=0
    # and the padded fc2 rows are zero) -> lane-dense matmuls.
    w1 = params['fc1_w']; b1 = params['fc1_b']
    w2 = params['fc2_w']; b2 = params['fc2_b']
    dh = w1.shape[1]
    pad = max(FC1_PAD - dh, 0)
    w1p = jnp.pad(w1, ((0, 0), (0, pad)))
    b1p = jnp.pad(b1, ((0, 0), (0, pad)))
    w2p = jnp.pad(w2, ((0, pad), (0, 0)))

    wsem0, bsem0 = params['semW'][0]
    wdep0, bdep0 = params['depW'][0]
    # layers 1,2 weights stacked so they travel as one block each
    wsem12 = jnp.stack([params['semW'][1][0], params['semW'][2][0]])            # (2,mem,mem)
    bsem12 = jnp.concatenate([params['semW'][1][1], params['semW'][2][1]], 0)   # (2,mem)
    wdep12 = jnp.stack([params['depW'][1][0], params['depW'][2][0]])
    bdep12 = jnp.concatenate([params['depW'][1][1], params['depW'][2][1]], 0)

    # half-size (B,S,S) DMA / double-buffer when running reduced precision
    adj_in = adj_dep if MATMUL_DTYPE == jnp.float32 else adj_dep.astype(MATMUL_DTYPE)

    weights = [params['wq'], params['bq'], params['wk'], params['bk'],
               wsem0, bsem0, wdep0, bdep0,
               wsem12, bsem12, wdep12, bdep12,
               params['fc3_w'], params['fc3_b'], params['fc4_w'], params['fc4_b'],
               w1p, b1p, w2p, b2]
    args = [x, mask_b1s, adj_in] + weights

    def wspec(arr):
        nd = arr.ndim
        # TODO(synk): at production scale add pipeline_mode=pl.Buffered(1):
        #   constant index_map => double-buffering weights only wastes VMEM.
        return pl.BlockSpec(arr.shape, lambda b: (0,) * nd)

    in_specs = [
        pl.BlockSpec((1, S, H), lambda b: (b, 0, 0)),
        pl.BlockSpec((1, 1, S), lambda b: (b, 0, 0)),
        pl.BlockSpec((1, S, S), lambda b: (b, 0, 0)),
    ] + [wspec(a) for a in weights]

    out_shapes = (jax.ShapeDtypeStruct((B, S, mem), jnp.float32),
                  jax.ShapeDtypeStruct((B, S, mem), jnp.float32))
    out_specs = (pl.BlockSpec((1, S, mem), lambda b: (b, 0, 0)),
                 pl.BlockSpec((1, S, mem), lambda b: (b, 0, 0)))

    # VMEM working-set estimate: double-buffered per-batch blocks + weights +
    # outputs + resident intermediates (head scores, adjacencies, GCN state).
    itemsize = 4
    per_batch = (S * H + S + S * S) * itemsize
    w_bytes = sum(math.prod(a.shape) for a in weights) * itemsize
    out_bytes = 2 * S * mem * itemsize
    interm = (2 * N_HEADS * S * S + 6 * S * S + 8 * S * H) * itemsize
    est = 2 * per_batch + 2 * w_bytes + 2 * out_bytes + interm

    kern = functools.partial(_fused_gcn_kernel, n_heads=N_HEADS, n_layers=N_LAYERS)
    return pl.pallas_call(
        kern,
        out_shape=out_shapes,
        grid=(B,),
        in_specs=in_specs,
        out_specs=out_specs,
        compiler_params=pltpu.CompilerParams(
            dimension_semantics=("parallel",),          # megacore on v7x
            vmem_limit_bytes=_vmem_limit_bytes(est)),
    )(*args)


# =============================================================================
# Kernel 2: scope contrastive loss, both directions, all masks, fused
# =============================================================================
def _cl_fused_kernel(h1_ref, h2_ref, smask_ref, amask_ref, loss_ref, *, n_masks):
    z1 = h1_ref[0]      # (S, D) f32
    z2 = h2_ref[0]
    S, D = z1.shape
    inv_t = jnp.float32(1.0 / HYPER2)

    def normalize(v):
        ssq = jnp.sum(v * v, axis=1, keepdims=True)
        return v * lax.rsqrt(jnp.maximum(ssq, 1e-24))

    n1 = normalize(z1)
    n2 = normalize(z2)

    # Gram matrices stay f32: exp(x / 0.12) amplifies operand rounding.
    def gram(a, b):
        return lax.dot_general(a, b, (((1,), (1,)), ((), ())),
                               preferred_element_type=jnp.float32)

    sim12 = gram(n1, n2)
    sim11 = gram(n1, n1)
    sim22 = gram(n2, n2)
    sim21 = jnp.transpose(sim12)            # XLU transpose, no 4th Gram
    d12 = jnp.sum(n1 * n2, axis=1)          # diag(sim12) == diag(sim21)
    # diag(sim11) == diag(sim22) == 1 after normalize()

    # All (S,S) exponentials hoisted out of the per-mask loop (EUP slot is the
    # CL bottleneck): per-mask work becomes cheap VPU selects + XLU row sums.
    e12 = jnp.exp(sim12 * inv_t)
    e21 = jnp.transpose(e12)                # exp(sim21 / T)
    e11 = jnp.exp(sim11 * inv_t)
    e22 = jnp.exp(sim22 * inv_t)
    ew12 = jnp.exp(sim12 * (d12[:, None] * inv_t))   # weighted_between, dir 1
    ew21 = jnp.exp(sim21 * (d12[:, None] * inv_t))   # weighted_between, dir 2
    e_d = jnp.exp(d12 * inv_t)              # (S,)
    e_d2 = jnp.exp(d12 * d12 * inv_t)       # (S,)
    e_one = math.exp(1.0 / HYPER2)          # exp(diag(simAA)/T), scalar const

    def one_direction(E_ab, E_aa, E_w, a_m, s_m):
        # masks are exactly {0,1}: exp(m * x / T) == where(m, exp(x/T), 1)
        a_col = a_m[:, None] > 0.0
        s_row = s_m[None, :] > 0.0
        as_v = (a_m * s_m) > 0.0
        m_all = jnp.where(a_col, E_aa + E_ab, 2.0)          # m_refl + m_between
        as_refl = jnp.where(a_col & s_row, E_aa, 1.0)
        weighted = jnp.where(as_v[:, None] & s_row, E_w, 1.0)
        pos = (jnp.where(as_v, e_d, 1.0)                    # diag(as_between)
               + jnp.sum(as_refl, axis=1) - jnp.where(as_v, e_one, 1.0)
               + jnp.sum(weighted, axis=1) - jnp.where(as_v, e_d2, 1.0))
        alle = jnp.sum(m_all, axis=1) - jnp.where(a_m > 0.0, e_one, 1.0)
        return -jnp.log(pos / alle)

    acc = jnp.zeros((S,), jnp.float32)
    # TODO(synk): switch to lax.fori_loop if n_masks gets large.
    for n in range(n_masks):
        s_m = smask_ref[0, n].astype(jnp.float32)   # (S,)
        a_m = amask_ref[0, n].astype(jnp.float32)
        l1 = one_direction(e12, e11, ew12, a_m, s_m)    # (z1=h1, z2=h2)
        l2 = one_direction(e21, e22, ew21, a_m, s_m)    # (z1=h2, z2=h1)
        acc = acc + 0.5 * (l1 + l2)

    loss_ref[0, 0] = acc * (1.0 / n_masks)


def scope_cl_loss(h1, h2, s_masks, a_masks):
    """Returns mask-averaged, direction-averaged loss of shape (B, 1, S)."""
    B, S, D = h1.shape
    N = s_masks.shape[1]

    itemsize = 4
    per_batch = (2 * S * D + 2 * N * S + S) * itemsize
    interm = 10 * S * S * itemsize          # resident sim / exp matrices
    est = 2 * per_batch + interm

    kern = functools.partial(_cl_fused_kernel, n_masks=N)
    return pl.pallas_call(
        kern,
        out_shape=jax.ShapeDtypeStruct((B, 1, S), jnp.float32),
        grid=(B,),
        in_specs=[
            pl.BlockSpec((1, S, D), lambda b: (b, 0, 0)),
            pl.BlockSpec((1, S, D), lambda b: (b, 0, 0)),
            pl.BlockSpec((1, N, S), lambda b: (b, 0, 0)),
            pl.BlockSpec((1, N, S), lambda b: (b, 0, 0)),
        ],
        out_specs=pl.BlockSpec((1, 1, S), lambda b: (b, 0, 0)),
        compiler_params=pltpu.CompilerParams(
            dimension_semantics=("parallel",),
            vmem_limit_bytes=_vmem_limit_bytes(est)),
    )(h1, h2, s_masks, a_masks)


# =============================================================================
# Parameter init (deterministic, synthetic)
# =============================================================================
def init_params(key, hidden):
    mem = hidden // 2
    keys = jax.random.split(key, 32)
    k = iter(keys)

    def lin(kk, din, dout, scale=None):
        scale = scale if scale is not None else 1.0 / math.sqrt(din)
        w = jax.random.normal(kk, (din, dout), jnp.float32) * scale
        b = jnp.zeros((1, dout), jnp.float32)
        return w, b

    p = {}
    p['wq'], p['bq'] = lin(next(k), hidden, hidden)
    p['wk'], p['bk'] = lin(next(k), hidden, hidden)
    p['semW'] = []
    p['depW'] = []
    for l in range(N_LAYERS):
        din = hidden if l == 0 else mem
        p['semW'].append(lin(next(k), din, mem))
        p['depW'].append(lin(next(k), din, mem))
    p['fc1_w'], p['fc1_b'] = lin(next(k), mem, 32)
    p['fc2_w'], p['fc2_b'] = lin(next(k), 32, mem)
    p['fc3_w'], p['fc3_b'] = lin(next(k), mem, mem)
    p['fc4_w'], p['fc4_b'] = lin(next(k), hidden, mem)
    p['cls_w'], p['cls_b'] = lin(next(k), 2 * hidden, 2)
    return p


# =============================================================================
# Forward (kernels + small plain-JAX glue)
# =============================================================================
def dqpsa_forward(params, sequence_output, pooled_output, text_atts,
                  adj_matrix, nouns_scope, nouns_mask, noun_targets,
                  loss_itc=0.0, loss_itm=0.0, loss_lm=0.0):
    B, S, H = sequence_output.shape
    mask_b1s = text_atts.reshape(B, 1, S).astype(jnp.float32)

    # --- attention adjacency + gated GCN stack + projections (Kernel 1) ---
    h1, h2 = fused_gcn_projection(params, sequence_output, mask_b1s, adj_matrix)

    # --- contrastive scope loss, both directions fused (Kernel 2) ---
    loss = scope_cl_loss(h1, h2, nouns_scope, nouns_mask)[:, 0, :]   # (B, S)
    loss_avg = loss.mean(axis=1, keepdims=True)
    loss_cl = loss_avg.mean()

    # --- aspect classification head (small glue, plain JAX) ---
    n_mask = nouns_mask.astype(jnp.float32)                        # (B, N, S)
    asp_wn = jnp.clip(n_mask.sum(-1, keepdims=True), 1.0, None)    # (B, N, 1)
    sum1 = jnp.einsum('bns,bsd->bnd', n_mask, h1)
    sum2 = jnp.einsum('bns,bsd->bnd', n_mask, h2)
    outputs1 = sum1 / asp_wn
    outputs2 = sum2 / asp_wn
    Bn, Nn = noun_targets.shape
    pooled_rep = jnp.broadcast_to(pooled_output[:, None, :], (Bn, Nn, H))
    final = jnp.concatenate([outputs1, outputs2, pooled_rep], axis=-1)  # (B, N, 2H)
    logits = jnp.einsum('bnf,fo->bno', final, params['cls_w']) + params['cls_b'][0]
    logp = jax.nn.log_softmax(logits, axis=-1)
    ce = -jnp.take_along_axis(logp, noun_targets[..., None], axis=-1)[..., 0]  # (B, N)
    loss_target = ce.mean(axis=1).sum()      # += of per-batch CE(mean) over batches
    preds = jnp.argmax(logits, axis=-1)
    n_correct = jnp.sum((preds == noun_targets) & (noun_targets == 1))
    n_pred = jnp.sum(preds == 1)
    n_label = jnp.sum(noun_targets == 1)

    loss_classify = loss_target
    loss_cls_cl = loss_classify + HYPER3 * loss_cl
    total_loss = (ITC_W * loss_itc + ITM_W * loss_itm + LM_W * loss_lm
                  + CL_W * loss_cls_cl)

    return {
        'total_loss': total_loss,
        'loss_cl': loss_cl,
        'loss_itm': jnp.float32(loss_itm),
        'loss_itc': jnp.float32(loss_itc),
        'loss_lm': jnp.float32(loss_lm),
        'n_correct': n_correct,
        'n_pred': n_pred,
        'n_label': n_label,
    }


# =============================================================================
if __name__ == "__main__":
    B, S, H, N = 2, 8, 32, 3     # batch, seq, hidden, noun-masks per example
    key = jax.random.PRNGKey(0)
    kp, k1, k2, k3, k4, k5, k6 = jax.random.split(key, 7)

    params = init_params(kp, H)

    sequence_output = jax.random.normal(k1, (B, S, H), jnp.float32)
    pooled_output = jax.random.normal(k2, (B, H), jnp.float32)
    text_atts = jnp.ones((B, S), jnp.float32).at[1, S - 1].set(0.0)
    adj_matrix = jax.random.uniform(k3, (B, S, S), jnp.float32)
    nouns_scope = (jax.random.uniform(k4, (B, N, S)) > 0.5).astype(jnp.float32)
    nouns_mask = (jax.random.uniform(k5, (B, N, S)) > 0.6).astype(jnp.float32)
    noun_targets = jax.random.randint(k6, (B, N), 0, 2, dtype=jnp.int32)

    out = dqpsa_forward(params, sequence_output, pooled_output, text_atts,
                        adj_matrix, nouns_scope, nouns_mask, noun_targets,
                        loss_itc=0.0, loss_itm=0.0, loss_lm=0.0)
    jax.block_until_ready(out)

    assert bool(jnp.isfinite(out['total_loss'])), "non-finite total_loss"
    assert bool(jnp.isfinite(out['loss_cl'])), "non-finite loss_cl"
    print("KERNEL_OK")
</pallas_src>

<mosaic_0001>
module attributes {stable_mosaic.version = 11 : i64} {
  func.func @_fused_gcn_kernel(%arg0: i32, %arg1: memref<1x8x32xf32, #tpu.memory_space<vmem>>, %arg2: memref<1x1x8xf32, #tpu.memory_space<vmem>>, %arg3: memref<1x8x8xf32, #tpu.memory_space<vmem>>, %arg4: memref<32x32xf32, #tpu.memory_space<vmem>>, %arg5: memref<1x32xf32, #tpu.memory_space<vmem>>, %arg6: memref<32x32xf32, #tpu.memory_space<vmem>>, %arg7: memref<1x32xf32, #tpu.memory_space<vmem>>, %arg8: memref<32x16xf32, #tpu.memory_space<vmem>>, %arg9: memref<1x16xf32, #tpu.memory_space<vmem>>, %arg10: memref<32x16xf32, #tpu.memory_space<vmem>>, %arg11: memref<1x16xf32, #tpu.memory_space<vmem>>, %arg12: memref<2x16x16xf32, #tpu.memory_space<vmem>>, %arg13: memref<2x16xf32, #tpu.memory_space<vmem>>, %arg14: memref<2x16x16xf32, #tpu.memory_space<vmem>>, %arg15: memref<2x16xf32, #tpu.memory_space<vmem>>, %arg16: memref<16x16xf32, #tpu.memory_space<vmem>>, %arg17: memref<1x16xf32, #tpu.memory_space<vmem>>, %arg18: memref<32x16xf32, #tpu.memory_space<vmem>>, %arg19: memref<1x16xf32, #tpu.memory_space<vmem>>, %arg20: memref<16x128xf32, #tpu.memory_space<vmem>>, %arg21: memref<1x128xf32, #tpu.memory_space<vmem>>, %arg22: memref<128x16xf32, #tpu.memory_space<vmem>>, %arg23: memref<1x16xf32, #tpu.memory_space<vmem>>, %arg24: memref<1x8x16xf32, #tpu.memory_space<vmem>>, %arg25: memref<1x8x16xf32, #tpu.memory_space<vmem>>) attributes {dimension_semantics = [#tpu.dimension_semantics<parallel>], iteration_bounds = array<i64: 2>, scalar_prefetch = 0 : i64, scratch_operands = 0 : i64, tpu.core_type = #tpu.core_type<tc>, window_params = [{transform_indices = @transform_0, window_bounds = array<i64: 1, 8, 32>}, {transform_indices = @transform_1, window_bounds = array<i64: 1, 1, 8>}, {transform_indices = @transform_2, window_bounds = array<i64: 1, 8, 8>}, {pipeline_mode = #tpu.pipeline_mode<synchronous>, transform_indices = @transform_3, window_bounds = array<i64: 32, 32>}, {pipeline_mode = #tpu.pipeline_mode<synchronous>, transform_indices = @transform_4, window_bounds = array<i64: 1, 32>}, {pipeline_mode = #tpu.pipeline_mode<synchronous>, transform_indices = @transform_5, window_bounds = array<i64: 32, 32>}, {pipeline_mode = #tpu.pipeline_mode<synchronous>, transform_indices = @transform_6, window_bounds = array<i64: 1, 32>}, {pipeline_mode = #tpu.pipeline_mode<synchronous>, transform_indices = @transform_7, window_bounds = array<i64: 32, 16>}, {pipeline_mode = #tpu.pipeline_mode<synchronous>, transform_indices = @transform_8, window_bounds = array<i64: 1, 16>}, {pipeline_mode = #tpu.pipeline_mode<synchronous>, transform_indices = @transform_9, window_bounds = array<i64: 32, 16>}, {pipeline_mode = #tpu.pipeline_mode<synchronous>, transform_indices = @transform_10, window_bounds = array<i64: 1, 16>}, {pipeline_mode = #tpu.pipeline_mode<synchronous>, transform_indices = @transform_11, window_bounds = array<i64: 2, 16, 16>}, {pipeline_mode = #tpu.pipeline_mode<synchronous>, transform_indices = @transform_12, window_bounds = array<i64: 2, 16>}, {pipeline_mode = #tpu.pipeline_mode<synchronous>, transform_indices = @transform_13, window_bounds = array<i64: 2, 16, 16>}, {pipeline_mode = #tpu.pipeline_mode<synchronous>, transform_indices = @transform_14, window_bounds = array<i64: 2, 16>}, {pipeline_mode = #tpu.pipeline_mode<synchronous>, transform_indices = @transform_15, window_bounds = array<i64: 16, 16>}, {pipeline_mode = #tpu.pipeline_mode<synchronous>, transform_indices = @transform_16, window_bounds = array<i64: 1, 16>}, {pipeline_mode = #tpu.pipeline_mode<synchronous>, transform_indices = @transform_17, window_bounds = array<i64: 32, 16>}, {pipeline_mode = #tpu.pipeline_mode<synchronous>, transform_indices = @transform_18, window_bounds = array<i64: 1, 16>}, {pipeline_mode = #tpu.pipeline_mode<synchronous>, transform_indices = @transform_19, window_bounds = array<i64: 16, 128>}, {pipeline_mode = #tpu.pipeline_mode<synchronous>, transform_indices = @transform_20, window_bounds = array<i64: 1, 128>}, {pipeline_mode = #tpu.pipeline_mode<synchronous>, transform_indices = @transform_21, window_bounds = array<i64: 128, 16>}, {pipeline_mode = #tpu.pipeline_mode<synchronous>, transform_indices = @transform_22, window_bounds = array<i64: 1, 16>}, {transform_indices = @transform_23, window_bounds = array<i64: 1, 8, 16>}, {transform_indices = @transform_24, window_bounds = array<i64: 1, 8, 16>}]} {
    %c0 = arith.constant 0 : index
    %c0_0 = arith.constant 0 : index
    %c0_1 = arith.constant 0 : index
    %0 = vector.load %arg1[%c0, %c0_0, %c0_1] : memref<1x8x32xf32, #tpu.memory_space<vmem>>, vector<1x8x32xf32>
    %1 = vector.shape_cast %0 : vector<1x8x32xf32> to vector<8x32xf32>
    %c0_2 = arith.constant 0 : index
    %c0_3 = arith.constant 0 : index
    %c0_4 = arith.constant 0 : index
    %2 = vector.load %arg2[%c0_2, %c0_3, %c0_4] : memref<1x1x8xf32, #tpu.memory_space<vmem>>, vector<1x1x8xf32>
    %3 = vector.shape_cast %2 : vector<1x1x8xf32> to vector<1x8xf32>
    %c0_5 = arith.constant 0 : index
    %c0_6 = arith.constant 0 : index
    %c0_7 = arith.constant 0 : index
    %4 = vector.load %arg3[%c0_5, %c0_6, %c0_7] : memref<1x8x8xf32, #tpu.memory_space<vmem>>, vector<1x8x8xf32>
    %5 = vector.shape_cast %4 : vector<1x8x8xf32> to vector<8x8xf32>
    %c0_8 = arith.constant 0 : index
    %c0_9 = arith.constant 0 : index
    %6 = vector.load %arg4[%c0_8, %c0_9] : memref<32x32xf32, #tpu.memory_space<vmem>>, vector<32x32xf32>
    %cst = arith.constant dense<0.000000e+00> : vector<8x32xf32>
    %7 = tpu.matmul %1, %6, %cst {dimension_numbers = #tpu.dot_dimension_numbers<[1], [0], [0], [1], [0, 0, 1, 1], [], []>} : vector<8x32xf32>, vector<32x32xf32>, vector<8x32xf32> -> vector<8x32xf32>
    %c0_10 = arith.constant 0 : index
    %c0_11 = arith.constant 0 : index
    %8 = vector.load %arg5[%c0_10, %c0_11] : memref<1x32xf32, #tpu.memory_space<vmem>>, vector<1x32xf32>
    %9 = vector.shape_cast %8 : vector<1x32xf32> to vector<32xf32>
    %10 = vector.shape_cast %9 : vector<32xf32> to vector<1x32xf32>
    %11 = vector.broadcast %10 : vector<1x32xf32> to vector<8x32xf32>
    %12 = arith.addf %7, %11 : vector<8x32xf32>
    %c0_12 = arith.constant 0 : index
    %c0_13 = arith.constant 0 : index
    %13 = vector.load %arg6[%c0_12, %c0_13] : memref<32x32xf32, #tpu.memory_space<vmem>>, vector<32x32xf32>
    %cst_14 = arith.constant dense<0.000000e+00> : vector<8x32xf32>
    %14 = tpu.matmul %1, %13, %cst_14 {dimension_numbers = #tpu.dot_dimension_numbers<[1], [0], [0], [1], [0, 0, 1, 1], [], []>} : vector<8x32xf32>, vector<32x32xf32>, vector<8x32xf32> -> vector<8x32xf32>
    %c0_15 = arith.constant 0 : index
    %c0_16 = arith.constant 0 : index
    %15 = vector.load %arg7[%c0_15, %c0_16] : memref<1x32xf32, #tpu.memory_space<vmem>>, vector<1x32xf32>
    %16 = vector.shape_cast %15 : vector<1x32xf32> to vector<32xf32>
    %17 = vector.shape_cast %16 : vector<32xf32> to vector<1x32xf32>
    %18 = vector.broadcast %17 : vector<1x32xf32> to vector<8x32xf32>
    %19 = arith.addf %14, %18 : vector<8x32xf32>
    %20 = vector.extract_strided_slice %12 {offsets = [0, 0], sizes = [8, 4], strides = [1, 1]} : vector<8x32xf32> to vector<8x4xf32>
    %21 = vector.extract_strided_slice %12 {offsets = [0, 4], sizes = [8, 4], strides = [1, 1]} : vector<8x32xf32> to vector<8x4xf32>
    %22 = vector.extract_strided_slice %12 {offsets = [0, 8], sizes = [8, 4], strides = [1, 1]} : vector<8x32xf32> to vector<8x4xf32>
    %23 = vector.extract_strided_slice %12 {offsets = [0, 12], sizes = [8, 4], strides = [1, 1]} : vector<8x32xf32> to vector<8x4xf32>
    %24 = vector.extract_strided_slice %12 {offsets = [0, 16], sizes = [8, 4], strides = [1, 1]} : vector<8x32xf32> to vector<8x4xf32>
    %25 = vector.extract_strided_slice %12 {offsets = [0, 20], sizes = [8, 4], strides = [1, 1]} : vector<8x32xf32> to vector<8x4xf32>
    %26 = vector.extract_strided_slice %12 {offsets = [0, 24], sizes = [8, 4], strides = [1, 1]} : vector<8x32xf32> to vector<8x4xf32>
    %27 = vector.extract_strided_slice %12 {offsets = [0, 28], sizes = [8, 4], strides = [1, 1]} : vector<8x32xf32> to vector<8x4xf32>
    %28 = vector.shape_cast %20 : vector<8x4xf32> to vector<1x8x4xf32>
    %29 = vector.shape_cast %21 : vector<8x4xf32> to vector<1x8x4xf32>
    %30 = vector.shape_cast %22 : vector<8x4xf32> to vector<1x8x4xf32>
    %31 = vector.shape_cast %23 : vector<8x4xf32> to vector<1x8x4xf32>
    %32 = vector.shape_cast %24 : vector<8x4xf32> to vector<1x8x4xf32>
    %33 = vector.shape_cast %25 : vector<8x4xf32> to vector<1x8x4xf32>
    %34 = vector.shape_cast %26 : vector<8x4xf32> to vector<1x8x4xf32>
    %35 = vector.shape_cast %27 : vector<8x4xf32> to vector<1x8x4xf32>
    %36 = tpu.concatenate %28, %29, %30, %31, %32, %33, %34, %35 in 0 : vector<1x8x4xf32>, vector<1x8x4xf32>, vector<1x8x4xf32>, vector<1x8x4xf32>, vector<1x8x4xf32>, vector<1x8x4xf32>, vector<1x8x4xf32>, vector<1x8x4xf32> -> vector<8x8x4xf32>
    %37 = vector.extract_strided_slice %19 {offsets = [0, 0], sizes = [8, 4], strides = [1, 1]} : vector<8x32xf32> to vector<8x4xf32>
    %38 = vector.extract_strided_slice %19 {offsets = [0, 4], sizes = [8, 4], strides = [1, 1]} : vector<8x32xf32> to vector<8x4xf32>
    %39 = vector.extract_strided_slice %19 {offsets = [0, 8], sizes = [8, 4], strides = [1, 1]} : vector<8x32xf32> to vector<8x4xf32>
    %40 = vector.extract_strided_slice %19 {offsets = [0, 12], sizes = [8, 4], strides = [1, 1]} : vector<8x32xf32> to vector<8x4xf32>
    %41 = vector.extract_strided_slice %19 {offsets = [0, 16], sizes = [8, 4], strides = [1, 1]} : vector<8x32xf32> to vector<8x4xf32>
    %42 = vector.extract_strided_slice %19 {offsets = [0, 20], sizes = [8, 4], strides = [1, 1]} : vector<8x32xf32> to vector<8x4xf32>
    %43 = vector.extract_strided_slice %19 {offsets = [0, 24], sizes = [8, 4], strides = [1, 1]} : vector<8x32xf32> to vector<8x4xf32>
    %44 = vector.extract_strided_slice %19 {offsets = [0, 28], sizes = [8, 4], strides = [1, 1]} : vector<8x32xf32> to vector<8x4xf32>
    %45 = vector.shape_cast %37 : vector<8x4xf32> to vector<1x8x4xf32>
    %46 = vector.shape_cast %38 : vector<8x4xf32> to vector<1x8x4xf32>
    %47 = vector.shape_cast %39 : vector<8x4xf32> to vector<1x8x4xf32>
    %48 = vector.shape_cast %40 : vector<8x4xf32> to vector<1x8x4xf32>
    %49 = vector.shape_cast %41 : vector<8x4xf32> to vector<1x8x4xf32>
    %50 = vector.shape_cast %42 : vector<8x4xf32> to vector<1x8x4xf32>
    %51 = vector.shape_cast %43 : vector<8x4xf32> to vector<1x8x4xf32>
    %52 = vector.shape_cast %44 : vector<8x4xf32> to vector<1x8x4xf32>
    %53 = tpu.concatenate %45, %46, %47, %48, %49, %50, %51, %52 in 0 : vector<1x8x4xf32>, vector<1x8x4xf32>, vector<1x8x4xf32>, vector<1x8x4xf32>, vector<1x8x4xf32>, vector<1x8x4xf32>, vector<1x8x4xf32>, vector<1x8x4xf32> -> vector<8x8x4xf32>
    "tpu.trace_start"() <{level = 10 : i32, message = "hqd,hkd->hqk"}> : () -> ()
    %cst_17 = arith.constant dense<0.000000e+00> : vector<8x8x8xf32>
    %54 = tpu.matmul %36, %53, %cst_17 {dimension_numbers = #tpu.dot_dimension_numbers<[2], [2], [1], [1], [0, 0, 0, 1, 1, 1], [0], [0]>} : vector<8x8x4xf32>, vector<8x8x4xf32>, vector<8x8x8xf32> -> vector<8x8x8xf32>
    "tpu.trace_stop"() : () -> ()
    %cst_18 = arith.constant 5.000000e-01 : f32
    %55 = vector.broadcast %cst_18 : f32 to vector<8x8x8xf32>
    %56 = arith.mulf %54, %55 : vector<8x8x8xf32>
    %57 = vector.shape_cast %3 : vector<1x8xf32> to vector<1x1x8xf32>
    %cst_19 = arith.constant 0.000000e+00 : f32
    %58 = vector.broadcast %cst_19 : f32 to vector<1x1x8xf32>
    %59 = arith.cmpf oeq, %57, %58 : vector<1x1x8xf32>
    %cst_20 = arith.constant -1.000000e+04 : f32
    %60 = vector.shape_cast %59 : vector<1x1x8xi1> to vector<1x1x8xi1>
    %61 = vector.broadcast %60 : vector<1x1x8xi1> to vector<8x8x8xi1>
    %62 = vector.broadcast %cst_20 : f32 to vector<8x8x8xf32>
    %63 = arith.select %61, %62, %56 : vector<8x8x8xi1>, vector<8x8x8xf32>
    %cst_21 = arith.constant dense<0xFF800000> : vector<8x8xf32>
    %64 = vector.multi_reduction <maximumf>, %63, %cst_21 [2] : vector<8x8x8xf32> to vector<8x8xf32>
    %cst_22 = arith.constant 0xFF800000 : f32
    %65 = vector.broadcast %cst_22 : f32 to vector<8x8xf32>
    %66 = arith.maximumf %65, %64 : vector<8x8xf32>
    %67 = vector.shape_cast %66 : vector<8x8xf32> to vector<8x8x1xf32>
    %68 = vector.broadcast %67 : vector<8x8x1xf32> to vector<8x8x8xf32>
    %69 = arith.subf %63, %68 : vector<8x8x8xf32>
    %70 = math.exp %69 : vector<8x8x8xf32>
    %cst_23 = arith.constant dense<0.000000e+00> : vector<8x8xf32>
    %71 = vector.multi_reduction <add>, %70, %cst_23 [2] : vector<8x8x8xf32> to vector<8x8xf32>
    %72 = vector.shape_cast %71 : vector<8x8xf32> to vector<8x8x1xf32>
    %73 = vector.broadcast %72 : vector<8x8x1xf32> to vector<8x8x8xf32>
    %74 = arith.divf %70, %73 : vector<8x8x8xf32>
    %cst_24 = arith.constant dense<0.000000e+00> : vector<8x8xf32>
    %75 = vector.multi_reduction <add>, %74, %cst_24 [0] : vector<8x8x8xf32> to vector<8x8xf32>
    %cst_25 = arith.constant 8.000000e+00 : f32
    %76 = vector.broadcast %cst_25 : f32 to vector<8x8xf32>
    %77 = arith.divf %75, %76 : vector<8x8xf32>
    %78 = tpu.iota {dimensions = array<i32: 0>} : vector<8x1xi32>
    %79 = tpu.iota {dimensions = array<i32: 1>} : vector<1x8xi32>
    %80 = vector.broadcast %78 : vector<8x1xi32> to vector<8x8xi32>
    %81 = vector.broadcast %79 : vector<1x8xi32> to vector<8x8xi32>
    %82 = arith.cmpi eq, %80, %81 : vector<8x8xi32>
    %cst_26 = arith.constant 1.000000e+00 : f32
    %83 = vector.broadcast %cst_26 : f32 to vector<8x8xf32>
    %84 = arith.select %82, %83, %77 : vector<8x8xi1>, vector<8x8xf32>
    %85 = tpu.transpose %3, [1, 0] : vector<1x8xf32> -> vector<8x1xf32>
    %86 = vector.broadcast %85 : vector<8x1xf32> to vector<8x8xf32>
    %87 = arith.mulf %84, %86 : vector<8x8xf32>
    %c0_27 = arith.constant 0 : index
    %c0_28 = arith.constant 0 : index
    %88 = vector.load %arg8[%c0_27, %c0_28] : memref<32x16xf32, #tpu.memory_space<vmem>>, vector<32x16xf32>
    %c0_29 = arith.constant 0 : index
    %c0_30 = arith.constant 0 : index
    %89 = vector.load %arg9[%c0_29, %c0_30] : memref<1x16xf32, #tpu.memory_space<vmem>>, vector<1x16xf32>
    %90 = vector.shape_cast %89 : vector<1x16xf32> to vector<16xf32>
    %c0_31 = arith.constant 0 : index
    %c0_32 = arith.constant 0 : index
    %91 = vector.load %arg10[%c0_31, %c0_32] : memref<32x16xf32, #tpu.memory_space<vmem>>, vector<32x16xf32>
    %c0_33 = arith.constant 0 : index
    %c0_34 = arith.constant 0 : index
    %92 = vector.load %arg11[%c0_33, %c0_34] : memref<1x16xf32, #tpu.memory_space<vmem>>, vector<1x16xf32>
    %93 = vector.shape_cast %92 : vector<1x16xf32> to vector<16xf32>
    %cst_35 = arith.constant dense<0.000000e+00> : vector<8x16xf32>
    %94 = tpu.matmul %1, %88, %cst_35 {dimension_numbers = #tpu.dot_dimension_numbers<[1], [0], [0], [1], [0, 0, 1, 1], [], []>} : vector<8x32xf32>, vector<32x16xf32>, vector<8x16xf32> -> vector<8x16xf32>
    %cst_36 = arith.constant dense<0.000000e+00> : vector<8x16xf32>
    %95 = tpu.matmul %1, %91, %cst_36 {dimension_numbers = #tpu.dot_dimension_numbers<[1], [0], [0], [1], [0, 0, 1, 1], [], []>} : vector<8x32xf32>, vector<32x16xf32>, vector<8x16xf32> -> vector<8x16xf32>
    %cst_37 = arith.constant dense<0.000000e+00> : vector<8x16xf32>
    %96 = tpu.matmul %87, %94, %cst_37 {dimension_numbers = #tpu.dot_dimension_numbers<[1], [0], [0], [1], [0, 0, 1, 1], [], []>} : vector<8x8xf32>, vector<8x16xf32>, vector<8x16xf32> -> vector<8x16xf32>
    %97 = vector.shape_cast %90 : vector<16xf32> to vector<1x16xf32>
    %98 = vector.broadcast %97 : vector<1x16xf32> to vector<8x16xf32>
    %99 = arith.addf %96, %98 : vector<8x16xf32>
    %cst_38 = arith.constant dense<0.000000e+00> : vector<8x16xf32>
    %100 = tpu.matmul %5, %95, %cst_38 {dimension_numbers = #tpu.dot_dimension_numbers<[1], [0], [0], [1], [0, 0, 1, 1], [], []>} : vector<8x8xf32>, vector<8x16xf32>, vector<8x16xf32> -> vector<8x16xf32>
    %101 = vector.shape_cast %93 : vector<16xf32> to vector<1x16xf32>
    %102 = vector.broadcast %101 : vector<1x16xf32> to vector<8x16xf32>
    %103 = arith.addf %100, %102 : vector<8x16xf32>
    %104 = arith.negf %103 : vector<8x16xf32>
    %105 = math.exp %104 : vector<8x16xf32>
    %cst_39 = arith.constant 1.000000e+00 : f32
    %106 = vector.broadcast %cst_39 : f32 to vector<8x16xf32>
    %107 = arith.addf %106, %105 : vector<8x16xf32>
    %108 = arith.divf %106, %107 : vector<8x16xf32>
    %cst_40 = arith.constant 2.000000e-01 : f32
    %109 = vector.broadcast %cst_40 : f32 to vector<8x16xf32>
    %110 = arith.mulf %109, %108 : vector<8x16xf32>
    %cst_41 = arith.constant 1.000000e+00 : f32
    %111 = vector.broadcast %cst_41 : f32 to vector<8x16xf32>
    %112 = arith.subf %111, %110 : vector<8x16xf32>
    %113 = arith.mulf %112, %99 : vector<8x16xf32>
    %114 = arith.mulf %110, %103 : vector<8x16xf32>
    %115 = arith.addf %113, %114 : vector<8x16xf32>
    %c0_42 = arith.constant 0 : index
    %c0_43 = arith.constant 0 : index
    %116 = vector.load %arg16[%c0_42, %c0_43] : memref<16x16xf32, #tpu.memory_space<vmem>>, vector<16x16xf32>
    %cst_44 = arith.constant dense<0.000000e+00> : vector<8x16xf32>
    %117 = tpu.matmul %115, %116, %cst_44 {dimension_numbers = #tpu.dot_dimension_numbers<[1], [0], [0], [1], [0, 0, 1, 1], [], []>} : vector<8x16xf32>, vector<16x16xf32>, vector<8x16xf32> -> vector<8x16xf32>
    %c0_45 = arith.constant 0 : index
    %c0_46 = arith.constant 0 : index
    %118 = vector.load %arg17[%c0_45, %c0_46] : memref<1x16xf32, #tpu.memory_space<vmem>>, vector<1x16xf32>
    %119 = vector.shape_cast %118 : vector<1x16xf32> to vector<16xf32>
    %120 = vector.shape_cast %119 : vector<16xf32> to vector<1x16xf32>
    %121 = vector.broadcast %120 : vector<1x16xf32> to vector<8x16xf32>
    %122 = arith.addf %117, %121 : vector<8x16xf32>
    %cst_47 = arith.constant 0.000000e+00 : f32
    %123 = vector.broadcast %cst_47 : f32 to vector<8x16xf32>
    %124 = arith.maximumf %122, %123 : vector<8x16xf32>
    %c0_48 = arith.constant 0 : index
    %c0_49 = arith.constant 0 : index
    %125 = vector.load %arg18[%c0_48, %c0_49] : memref<32x16xf32, #tpu.memory_space<vmem>>, vector<32x16xf32>
    %cst_50 = arith.constant dense<0.000000e+00> : vector<8x16xf32>
    %126 = tpu.matmul %1, %125, %cst_50 {dimension_numbers = #tpu.dot_dimension_numbers<[1], [0], [0], [1], [0, 0, 1, 1], [], []>} : vector<8x32xf32>, vector<32x16xf32>, vector<8x16xf32> -> vector<8x16xf32>
    %c0_51 = arith.constant 0 : index
    %c0_52 = arith.constant 0 : index
    %127 = vector.load %arg19[%c0_51, %c0_52] : memref<1x16xf32, #tpu.memory_space<vmem>>, vector<1x16xf32>
    %128 = vector.shape_cast %127 : vector<1x16xf32> to vector<16xf32>
    %129 = vector.shape_cast %128 : vector<16xf32> to vector<1x16xf32>
    %130 = vector.broadcast %129 : vector<1x16xf32> to vector<8x16xf32>
    %131 = arith.addf %126, %130 : vector<8x16xf32>
    %132 = arith.negf %131 : vector<8x16xf32>
    %133 = math.exp %132 : vector<8x16xf32>
    %cst_53 = arith.constant 1.000000e+00 : f32
    %134 = vector.broadcast %cst_53 : f32 to vector<8x16xf32>
    %135 = arith.addf %134, %133 : vector<8x16xf32>
    %136 = arith.divf %134, %135 : vector<8x16xf32>
    %137 = arith.mulf %136, %124 : vector<8x16xf32>
    %cst_54 = arith.constant 1.000000e+00 : f32
    %138 = vector.broadcast %cst_54 : f32 to vector<8x16xf32>
    %139 = arith.subf %138, %136 : vector<8x16xf32>
    %140 = arith.mulf %139, %131 : vector<8x16xf32>
    %141 = arith.addf %137, %140 : vector<8x16xf32>
    %c0_55 = arith.constant 0 : index
    %c0_56 = arith.constant 0 : index
    %c0_57 = arith.constant 0 : index
    %142 = vector.load %arg12[%c0_55, %c0_56, %c0_57] : memref<2x16x16xf32, #tpu.memory_space<vmem>>, vector<1x16x16xf32>
    %143 = vector.shape_cast %142 : vector<1x16x16xf32> to vector<16x16xf32>
    %c0_58 = arith.constant 0 : index
    %c0_59 = arith.constant 0 : index
    %144 = vector.load %arg13[%c0_58, %c0_59] : memref<2x16xf32, #tpu.memory_space<vmem>>, vector<1x16xf32>
    %145 = vector.shape_cast %144 : vector<1x16xf32> to vector<16xf32>
    %c0_60 = arith.constant 0 : index
    %c0_61 = arith.constant 0 : index
    %c0_62 = arith.constant 0 : index
    %146 = vector.load %arg14[%c0_60, %c0_61, %c0_62] : memref<2x16x16xf32, #tpu.memory_space<vmem>>, vector<1x16x16xf32>
    %147 = vector.shape_cast %146 : vector<1x16x16xf32> to vector<16x16xf32>
    %c0_63 = arith.constant 0 : index
    %c0_64 = arith.constant 0 : index
    %148 = vector.load %arg15[%c0_63, %c0_64] : memref<2x16xf32, #tpu.memory_space<vmem>>, vector<1x16xf32>
    %149 = vector.shape_cast %148 : vector<1x16xf32> to vector<16xf32>
    %cst_65 = arith.constant dense<0.000000e+00> : vector<8x16xf32>
    %150 = tpu.matmul %141, %143, %cst_65 {dimension_numbers = #tpu.dot_dimension_numbers<[1], [0], [0], [1], [0, 0, 1, 1], [], []>} : vector<8x16xf32>, vector<16x16xf32>, vector<8x16xf32> -> vector<8x16xf32>
    %cst_66 = arith.constant dense<0.000000e+00> : vector<8x16xf32>
    %151 = tpu.matmul %141, %147, %cst_66 {dimension_numbers = #tpu.dot_dimension_numbers<[1], [0], [0], [1], [0, 0, 1, 1], [], []>} : vector<8x16xf32>, vector<16x16xf32>, vector<8x16xf32> -> vector<8x16xf32>
    %cst_67 = arith.constant dense<0.000000e+00> : vector<8x16xf32>
    %152 = tpu.matmul %87, %150, %cst_67 {dimension_numbers = #tpu.dot_dimension_numbers<[1], [0], [0], [1], [0, 0, 1, 1], [], []>} : vector<8x8xf32>, vector<8x16xf32>, vector<8x16xf32> -> vector<8x16xf32>
    %153 = vector.shape_cast %145 : vector<16xf32> to vector<1x16xf32>
    %154 = vector.broadcast %153 : vector<1x16xf32> to vector<8x16xf32>
    %155 = arith.addf %152, %154 : vector<8x16xf32>
    %cst_68 = arith.constant dense<0.000000e+00> : vector<8x16xf32>
    %156 = tpu.matmul %5, %151, %cst_68 {dimension_numbers = #tpu.dot_dimension_numbers<[1], [0], [0], [1], [0, 0, 1, 1], [], []>} : vector<8x8xf32>, vector<8x16xf32>, vector<8x16xf32> -> vector<8x16xf32>
    %157 = vector.shape_cast %149 : vector<16xf32> to vector<1x16xf32>
    %158 = vector.broadcast %157 : vector<1x16xf32> to vector<8x16xf32>
    %159 = arith.addf %156, %158 : vector<8x16xf32>
    %160 = arith.negf %159 : vector<8x16xf32>
    %161 = math.exp %160 : vector<8x16xf32>
    %cst_69 = arith.constant 1.000000e+00 : f32
    %162 = vector.broadcast %cst_69 : f32 to vector<8x16xf32>
    %163 = arith.addf %162, %161 : vector<8x16xf32>
    %164 = arith.divf %162, %163 : vector<8x16xf32>
    %cst_70 = arith.constant 2.000000e-01 : f32
    %165 = vector.broadcast %cst_70 : f32 to vector<8x16xf32>
    %166 = arith.mulf %165, %164 : vector<8x16xf32>
    %cst_71 = arith.constant 1.000000e+00 : f32
    %167 = vector.broadcast %cst_71 : f32 to vector<8x16xf32>
    %168 = arith.subf %167, %166 : vector<8x16xf32>
    %169 = arith.mulf %168, %155 : vector<8x16xf32>
    %170 = arith.mulf %166, %159 : vector<8x16xf32>
    %171 = arith.addf %169, %170 : vector<8x16xf32>
    %c0_72 = arith.constant 0 : index
    %c0_73 = arith.constant 0 : index
    %172 = vector.load %arg16[%c0_72, %c0_73] : memref<16x16xf32, #tpu.memory_space<vmem>>, vector<16x16xf32>
    %cst_74 = arith.constant dense<0.000000e+00> : vector<8x16xf32>
    %173 = tpu.matmul %171, %172, %cst_74 {dimension_numbers = #tpu.dot_dimension_numbers<[1], [0], [0], [1], [0, 0, 1, 1], [], []>} : vector<8x16xf32>, vector<16x16xf32>, vector<8x16xf32> -> vector<8x16xf32>
    %c0_75 = arith.constant 0 : index
    %c0_76 = arith.constant 0 : index
    %174 = vector.load %arg17[%c0_75, %c0_76] : memref<1x16xf32, #tpu.memory_space<vmem>>, vector<1x16xf32>
    %175 = vector.shape_cast %174 : vector<1x16xf32> to vector<16xf32>
    %176 = vector.shape_cast %175 : vector<16xf32> to vector<1x16xf32>
    %177 = vector.broadcast %176 : vector<1x16xf32> to vector<8x16xf32>
    %178 = arith.addf %173, %177 : vector<8x16xf32>
    %cst_77 = arith.constant 0.000000e+00 : f32
    %179 = vector.broadcast %cst_77 : f32 to vector<8x16xf32>
    %180 = arith.maximumf %178, %179 : vector<8x16xf32>
    %181 = arith.negf %141 : vector<8x16xf32>
    %182 = math.exp %181 : vector<8x16xf32>
    %cst_78 = arith.constant 1.000000e+00 : f32
    %183 = vector.broadcast %cst_78 : f32 to vector<8x16xf32>
    %184 = arith.addf %183, %182 : vector<8x16xf32>
    %185 = arith.divf %183, %184 : vector<8x16xf32>
    %186 = arith.mulf %185, %180 : vector<8x16xf32>
    %cst_79 = arith.constant 1.000000e+00 : f32
    %187 = vector.broadcast %cst_79 : f32 to vector<8x16xf32>
    %188 = arith.subf %187, %185 : vector<8x16xf32>
    %189 = arith.mulf %188, %141 : vector<8x16xf32>
    %190 = arith.addf %186, %189 : vector<8x16xf32>
    %c1 = arith.constant 1 : index
    %c0_80 = arith.constant 0 : index
    %c0_81 = arith.constant 0 : index
    %191 = vector.load %arg12[%c1, %c0_80, %c0_81] : memref<2x16x16xf32, #tpu.memory_space<vmem>>, vector<1x16x16xf32>
    %192 = vector.shape_cast %191 : vector<1x16x16xf32> to vector<16x16xf32>
    %c1_82 = arith.constant 1 : index
    %c0_83 = arith.constant 0 : index
    %193 = vector.load %arg13[%c1_82, %c0_83] : memref<2x16xf32, #tpu.memory_space<vmem>>, vector<1x16xf32>
    %194 = vector.shape_cast %193 : vector<1x16xf32> to vector<16xf32>
    %c1_84 = arith.constant 1 : index
    %c0_85 = arith.constant 0 : index
    %c0_86 = arith.constant 0 : index
    %195 = vector.load %arg14[%c1_84, %c0_85, %c0_86] : memref<2x16x16xf32, #tpu.memory_space<vmem>>, vector<1x16x16xf32>
    %196 = vector.shape_cast %195 : vector<1x16x16xf32> to vector<16x16xf32>
    %c1_87 = arith.constant 1 : index
    %c0_88 = arith.constant 0 : index
    %197 = vector.load %arg15[%c1_87, %c0_88] : memref<2x16xf32, #tpu.memory_space<vmem>>, vector<1x16xf32>
    %198 = vector.shape_cast %197 : vector<1x16xf32> to vector<16xf32>
    %cst_89 = arith.constant dense<0.000000e+00> : vector<8x16xf32>
    %199 = tpu.matmul %190, %192, %cst_89 {dimension_numbers = #tpu.dot_dimension_numbers<[1], [0], [0], [1], [0, 0, 1, 1], [], []>} : vector<8x16xf32>, vector<16x16xf32>, vector<8x16xf32> -> vector<8x16xf32>
    %cst_90 = arith.constant dense<0.000000e+00> : vector<8x16xf32>
    %200 = tpu.matmul %190, %196, %cst_90 {dimension_numbers = #tpu.dot_dimension_numbers<[1], [0], [0], [1], [0, 0, 1, 1], [], []>} : vector<8x16xf32>, vector<16x16xf32>, vector<8x16xf32> -> vector<8x16xf32>
    %cst_91 = arith.constant dense<0.000000e+00> : vector<8x16xf32>
    %201 = tpu.matmul %87, %199, %cst_91 {dimension_numbers = #tpu.dot_dimension_numbers<[1], [0], [0], [1], [0, 0, 1, 1], [], []>} : vector<8x8xf32>, vector<8x16xf32>, vector<8x16xf32> -> vector<8x16xf32>
    %202 = vector.shape_cast %194 : vector<16xf32> to vector<1x16xf32>
    %203 = vector.broadcast %202 : vector<1x16xf32> to vector<8x16xf32>
    %204 = arith.addf %201, %203 : vector<8x16xf32>
    %cst_92 = arith.constant dense<0.000000e+00> : vector<8x16xf32>
    %205 = tpu.matmul %5, %200, %cst_92 {dimension_numbers = #tpu.dot_dimension_numbers<[1], [0], [0], [1], [0, 0, 1, 1], [], []>} : vector<8x8xf32>, vector<8x16xf32>, vector<8x16xf32> -> vector<8x16xf32>
    %206 = vector.shape_cast %198 : vector<16xf32> to vector<1x16xf32>
    %207 = vector.broadcast %206 : vector<1x16xf32> to vector<8x16xf32>
    %208 = arith.addf %205, %207 : vector<8x16xf32>
    %209 = arith.negf %208 : vector<8x16xf32>
    %210 = math.exp %209 : vector<8x16xf32>
    %cst_93 = arith.constant 1.000000e+00 : f32
    %211 = vector.broadcast %cst_93 : f32 to vector<8x16xf32>
    %212 = arith.addf %211, %210 : vector<8x16xf32>
    %213 = arith.divf %211, %212 : vector<8x16xf32>
    %cst_94 = arith.constant 2.000000e-01 : f32
    %214 = vector.broadcast %cst_94 : f32 to vector<8x16xf32>
    %215 = arith.mulf %214, %213 : vector<8x16xf32>
    %cst_95 = arith.constant 1.000000e+00 : f32
    %216 = vector.broadcast %cst_95 : f32 to vector<8x16xf32>
    %217 = arith.subf %216, %215 : vector<8x16xf32>
    %218 = arith.mulf %217, %204 : vector<8x16xf32>
    %219 = arith.mulf %215, %208 : vector<8x16xf32>
    %220 = arith.addf %218, %219 : vector<8x16xf32>
    %c0_96 = arith.constant 0 : index
    %c0_97 = arith.constant 0 : index
    %221 = vector.load %arg16[%c0_96, %c0_97] : memref<16x16xf32, #tpu.memory_space<vmem>>, vector<16x16xf32>
    %cst_98 = arith.constant dense<0.000000e+00> : vector<8x16xf32>
    %222 = tpu.matmul %220, %221, %cst_98 {dimension_numbers = #tpu.dot_dimension_numbers<[1], [0], [0], [1], [0, 0, 1, 1], [], []>} : vector<8x16xf32>, vector<16x16xf32>, vector<8x16xf32> -> vector<8x16xf32>
    %c0_99 = arith.constant 0 : index
    %c0_100 = arith.constant 0 : index
    %223 = vector.load %arg17[%c0_99, %c0_100] : memref<1x16xf32, #tpu.memory_space<vmem>>, vector<1x16xf32>
    %224 = vector.shape_cast %223 : vector<1x16xf32> to vector<16xf32>
    %225 = vector.shape_cast %224 : vector<16xf32> to vector<1x16xf32>
    %226 = vector.broadcast %225 : vector<1x16xf32> to vector<8x16xf32>
    %227 = arith.addf %222, %226 : vector<8x16xf32>
    %cst_101 = arith.constant 0.000000e+00 : f32
    %228 = vector.broadcast %cst_101 : f32 to vector<8x16xf32>
    %229 = arith.maximumf %227, %228 : vector<8x16xf32>
    %230 = arith.negf %190 : vector<8x16xf32>
    %231 = math.exp %230 : vector<8x16xf32>
    %cst_102 = arith.constant 1.000000e+00 : f32
    %232 = vector.broadcast %cst_102 : f32 to vector<8x16xf32>
    %233 = arith.addf %232, %231 : vector<8x16xf32>
    %234 = arith.divf %232, %233 : vector<8x16xf32>
    %235 = arith.mulf %234, %229 : vector<8x16xf32>
    %cst_103 = arith.constant 1.000000e+00 : f32
    %236 = vector.broadcast %cst_103 : f32 to vector<8x16xf32>
    %237 = arith.subf %236, %234 : vector<8x16xf32>
    %238 = arith.mulf %237, %190 : vector<8x16xf32>
    %239 = arith.addf %235, %238 : vector<8x16xf32>
    %c0_104 = arith.constant 0 : index
    %c0_105 = arith.constant 0 : index
    %240 = vector.load %arg20[%c0_104, %c0_105] : memref<16x128xf32, #tpu.memory_space<vmem>>, vector<16x128xf32>
    %cst_106 = arith.constant dense<0.000000e+00> : vector<8x128xf32>
    %241 = tpu.matmul %239, %240, %cst_106 {dimension_numbers = #tpu.dot_dimension_numbers<[1], [0], [0], [1], [0, 0, 1, 1], [], []>} : vector<8x16xf32>, vector<16x128xf32>, vector<8x128xf32> -> vector<8x128xf32>
    %c0_107 = arith.constant 0 : index
    %c0_108 = arith.constant 0 : index
    %242 = vector.load %arg21[%c0_107, %c0_108] : memref<1x128xf32, #tpu.memory_space<vmem>>, vector<1x128xf32>
    %243 = vector.shape_cast %242 : vector<1x128xf32> to vector<128xf32>
    %244 = vector.shape_cast %243 : vector<128xf32> to vector<1x128xf32>
    %245 = vector.broadcast %244 : vector<1x128xf32> to vector<8x128xf32>
    %246 = arith.addf %241, %245 : vector<8x128xf32>
    %cst_109 = arith.constant 0.000000e+00 : f32
    %247 = vector.broadcast %cst_109 : f32 to vector<8x128xf32>
    %248 = arith.minimumf %246, %247 : vector<8x128xf32>
    %249 = math.exp %248 : vector<8x128xf32>
    %cst_110 = arith.constant 1.000000e+00 : f32
    %250 = vector.broadcast %cst_110 : f32 to vector<8x128xf32>
    %251 = arith.subf %249, %250 : vector<8x128xf32>
    %cst_111 = arith.constant 0.000000e+00 : f32
    %252 = vector.broadcast %cst_111 : f32 to vector<8x128xf32>
    %253 = arith.cmpf ogt, %246, %252 : vector<8x128xf32>
    %254 = arith.select %253, %246, %251 : vector<8x128xi1>, vector<8x128xf32>
    %c0_112 = arith.constant 0 : index
    %c0_113 = arith.constant 0 : index
    %255 = vector.load %arg22[%c0_112, %c0_113] : memref<128x16xf32, #tpu.memory_space<vmem>>, vector<128x16xf32>
    %cst_114 = arith.constant dense<0.000000e+00> : vector<8x16xf32>
    %256 = tpu.matmul %254, %255, %cst_114 {dimension_numbers = #tpu.dot_dimension_numbers<[1], [0], [0], [1], [0, 0, 1, 1], [], []>} : vector<8x128xf32>, vector<128x16xf32>, vector<8x16xf32> -> vector<8x16xf32>
    %c0_115 = arith.constant 0 : index
    %c0_116 = arith.constant 0 : index
    %257 = vector.load %arg23[%c0_115, %c0_116] : memref<1x16xf32, #tpu.memory_space<vmem>>, vector<1x16xf32>
    %258 = vector.shape_cast %257 : vector<1x16xf32> to vector<16xf32>
    %259 = vector.shape_cast %258 : vector<16xf32> to vector<1x16xf32>
    %260 = vector.broadcast %259 : vector<1x16xf32> to vector<8x16xf32>
    %261 = arith.addf %256, %260 : vector<8x16xf32>
    %c0_117 = arith.constant 0 : index
    %c0_118 = arith.constant 0 : index
    %c0_119 = arith.constant 0 : index
    %262 = vector.load %arg24[%c0_117, %c0_118, %c0_119] : memref<1x8x16xf32, #tpu.memory_space<vmem>>, vector<1x8x16xf32>
    %263 = vector.shape_cast %262 : vector<1x8x16xf32> to vector<8x16xf32>
    %264 = vector.shape_cast %261 : vector<8x16xf32> to vector<1x8x16xf32>
    tpu.vector_store %arg24[%c0_117, %c0_118, %c0_119], %264 {strides = array<i32>} : memref<1x8x16xf32, #tpu.memory_space<vmem>>, vector<1x8x16xf32>,
    %c0_120 = arith.constant 0 : index
    %c0_121 = arith.constant 0 : index
    %265 = vector.load %arg20[%c0_120, %c0_121] : memref<16x128xf32, #tpu.memory_space<vmem>>, vector<16x128xf32>
    %cst_122 = arith.constant dense<0.000000e+00> : vector<8x128xf32>
    %266 = tpu.matmul %204, %265, %cst_122 {dimension_numbers = #tpu.dot_dimension_numbers<[1], [0], [0], [1], [0, 0, 1, 1], [], []>} : vector<8x16xf32>, vector<16x128xf32>, vector<8x128xf32> -> vector<8x128xf32>
    %c0_123 = arith.constant 0 : index
    %c0_124 = arith.constant 0 : index
    %267 = vector.load %arg21[%c0_123, %c0_124] : memref<1x128xf32, #tpu.memory_space<vmem>>, vector<1x128xf32>
    %268 = vector.shape_cast %267 : vector<1x128xf32> to vector<128xf32>
    %269 = vector.shape_cast %268 : vector<128xf32> to vector<1x128xf32>
    %270 = vector.broadcast %269 : vector<1x128xf32> to vector<8x128xf32>
    %271 = arith.addf %266, %270 : vector<8x128xf32>
    %cst_125 = arith.constant 0.000000e+00 : f32
    %272 = vector.broadcast %cst_125 : f32 to vector<8x128xf32>
    %273 = arith.minimumf %271, %272 : vector<8x128xf32>
    %274 = math.exp %273 : vector<8x128xf32>
    %cst_126 = arith.constant 1.000000e+00 : f32
    %275 = vector.broadcast %cst_126 : f32 to vector<8x128xf32>
    %276 = arith.subf %274, %275 : vector<8x128xf32>
    %cst_127 = arith.constant 0.000000e+00 : f32
    %277 = vector.broadcast %cst_127 : f32 to vector<8x128xf32>
    %278 = arith.cmpf ogt, %271, %277 : vector<8x128xf32>
    %279 = arith.select %278, %271, %276 : vector<8x128xi1>, vector<8x128xf32>
    %c0_128 = arith.constant 0 : index
    %c0_129 = arith.constant 0 : index
    %280 = vector.load %arg22[%c0_128, %c0_129] : memref<128x16xf32, #tpu.memory_space<vmem>>, vector<128x16xf32>
    %cst_130 = arith.constant dense<0.000000e+00> : vector<8x16xf32>
    %281 = tpu.matmul %279, %280, %cst_130 {dimension_numbers = #tpu.dot_dimension_numbers<[1], [0], [0], [1], [0, 0, 1, 1], [], []>} : vector<8x128xf32>, vector<128x16xf32>, vector<8x16xf32> -> vector<8x16xf32>
    %c0_131 = arith.constant 0 : index
    %c0_132 = arith.constant 0 : index
    %282 = vector.load %arg23[%c0_131, %c0_132] : memref<1x16xf32, #tpu.memory_space<vmem>>, vector<1x16xf32>
    %283 = vector.shape_cast %282 : vector<1x16xf32> to vector<16xf32>
    %284 = vector.shape_cast %283 : vector<16xf32> to vector<1x16xf32>
    %285 = vector.broadcast %284 : vector<1x16xf32> to vector<8x16xf32>
    %286 = arith.addf %281, %285 : vector<8x16xf32>
    %c0_133 = arith.constant 0 : index
    %c0_134 = arith.constant 0 : index
    %c0_135 = arith.constant 0 : index
    %287 = vector.load %arg25[%c0_133, %c0_134, %c0_135] : memref<1x8x16xf32, #tpu.memory_space<vmem>>, vector<1x8x16xf32>
    %288 = vector.shape_cast %287 : vector<1x8x16xf32> to vector<8x16xf32>
    %289 = vector.shape_cast %286 : vector<8x16xf32> to vector<1x8x16xf32>
    tpu.vector_store %arg25[%c0_133, %c0_134, %c0_135], %289 {strides = array<i32>} : memref<1x8x16xf32, #tpu.memory_space<vmem>>, vector<1x8x16xf32>,
    return
  }
  func.func @transform_0(%arg0: i32) -> (i32, i32, i32) {
    %c0_i32 = arith.constant 0 : i32
    %c0_i32_0 = arith.constant 0 : i32
    %c0_i32_1 = arith.constant 0 : i32
    return %arg0, %c0_i32, %c0_i32_0 : i32, i32, i32
  }
  func.func @transform_1(%arg0: i32) -> (i32, i32, i32) {
    %c0_i32 = arith.constant 0 : i32
    %c0_i32_0 = arith.constant 0 : i32
    %c0_i32_1 = arith.constant 0 : i32
    return %arg0, %c0_i32, %c0_i32_0 : i32, i32, i32
  }
  func.func @transform_2(%arg0: i32) -> (i32, i32, i32) {
    %c0_i32 = arith.constant 0 : i32
    %c0_i32_0 = arith.constant 0 : i32
    %c0_i32_1 = arith.constant 0 : i32
    return %arg0, %c0_i32, %c0_i32_0 : i32, i32, i32
  }
  func.func @transform_3(%arg0: i32) -> (i32, i32) {
    %c0_i32 = arith.constant 0 : i32
    %c0_i32_0 = arith.constant 0 : i32
    %c0_i32_1 = arith.constant 0 : i32
    return %c0_i32, %c0_i32_0 : i32, i32
  }
  func.func @transform_4(%arg0: i32) -> (i32, i32) {
    %c0_i32 = arith.constant 0 : i32
    %c0_i32_0 = arith.constant 0 : i32
    %c0_i32_1 = arith.constant 0 : i32
    return %c0_i32, %c0_i32_0 : i32, i32
  }
  func.func @transform_5(%arg0: i32) -> (i32, i32) {
    %c0_i32 = arith.constant 0 : i32
    %c0_i32_0 = arith.constant 0 : i32
    %c0_i32_1 = arith.constant 0 : i32
    return %c0_i32, %c0_i32_0 : i32, i32
  }
  func.func @transform_6(%arg0: i32) -> (i32, i32) {
    %c0_i32 = arith.constant 0 : i32
    %c0_i32_0 = arith.constant 0 : i32
    %c0_i32_1 = arith.constant 0 : i32
    return %c0_i32, %c0_i32_0 : i32, i32
  }
  func.func @transform_7(%arg0: i32) -> (i32, i32) {
    %c0_i32 = arith.constant 0 : i32
    %c0_i32_0 = arith.constant 0 : i32
    %c0_i32_1 = arith.constant 0 : i32
    return %c0_i32, %c0_i32_0 : i32, i32
  }
  func.func @transform_8(%arg0: i32) -> (i32, i32) {
    %c0_i32 = arith.constant 0 : i32
    %c0_i32_0 = arith.constant 0 : i32
    %c0_i32_1 = arith.constant 0 : i32
    return %c0_i32, %c0_i32_0 : i32, i32
  }
  func.func @transform_9(%arg0: i32) -> (i32, i32) {
    %c0_i32 = arith.constant 0 : i32
    %c0_i32_0 = arith.constant 0 : i32
    %c0_i32_1 = arith.constant 0 : i32
    return %c0_i32, %c0_i32_0 : i32, i32
  }
  func.func @transform_10(%arg0: i32) -> (i32, i32) {
    %c0_i32 = arith.constant 0 : i32
    %c0_i32_0 = arith.constant 0 : i32
    %c0_i32_1 = arith.constant 0 : i32
    return %c0_i32, %c0_i32_0 : i32, i32
  }
  func.func @transform_11(%arg0: i32) -> (i32, i32, i32) {
    %c0_i32 = arith.constant 0 : i32
    %c0_i32_0 = arith.constant 0 : i32
    %c0_i32_1 = arith.constant 0 : i32
    %c0_i32_2 = arith.constant 0 : i32
    return %c0_i32, %c0_i32_0, %c0_i32_1 : i32, i32, i32
  }
  func.func @transform_12(%arg0: i32) -> (i32, i32) {
    %c0_i32 = arith.constant 0 : i32
    %c0_i32_0 = arith.constant 0 : i32
    %c0_i32_1 = arith.constant 0 : i32
    return %c0_i32, %c0_i32_0 : i32, i32
  }
  func.func @transform_13(%arg0: i32) -> (i32, i32, i32) {
    %c0_i32 = arith.constant 0 : i32
    %c0_i32_0 = arith.constant 0 : i32
    %c0_i32_1 = arith.constant 0 : i32
    %c0_i32_2 = arith.constant 0 : i32
    return %c0_i32, %c0_i32_0, %c0_i32_1 : i32, i32, i32
  }
  func.func @transform_14(%arg0: i32) -> (i32, i32) {
    %c0_i32 = arith.constant 0 : i32
    %c0_i32_0 = arith.constant 0 : i32
    %c0_i32_1 = arith.constant 0 : i32
    return %c0_i32, %c0_i32_0 : i32, i32
  }
  func.func @transform_15(%arg0: i32) -> (i32, i32) {
    %c0_i32 = arith.constant 0 : i32
    %c0_i32_0 = arith.constant 0 : i32
    %c0_i32_1 = arith.constant 0 : i32
    return %c0_i32, %c0_i32_0 : i32, i32
  }
  func.func @transform_16(%arg0: i32) -> (i32, i32) {
    %c0_i32 = arith.constant 0 : i32
    %c0_i32_0 = arith.constant 0 : i32
    %c0_i32_1 = arith.constant 0 : i32
    return %c0_i32, %c0_i32_0 : i32, i32
  }
  func.func @transform_17(%arg0: i32) -> (i32, i32) {
    %c0_i32 = arith.constant 0 : i32
    %c0_i32_0 = arith.constant 0 : i32
    %c0_i32_1 = arith.constant 0 : i32
    return %c0_i32, %c0_i32_0 : i32, i32
  }
  func.func @transform_18(%arg0: i32) -> (i32, i32) {
    %c0_i32 = arith.constant 0 : i32
    %c0_i32_0 = arith.constant 0 : i32
    %c0_i32_1 = arith.constant 0 : i32
    return %c0_i32, %c0_i32_0 : i32, i32
  }
  func.func @transform_19(%arg0: i32) -> (i32, i32) {
    %c0_i32 = arith.constant 0 : i32
    %c0_i32_0 = arith.constant 0 : i32
    %c0_i32_1 = arith.constant 0 : i32
    return %c0_i32, %c0_i32_0 : i32, i32
  }
  func.func @transform_20(%arg0: i32) -> (i32, i32) {
    %c0_i32 = arith.constant 0 : i32
    %c0_i32_0 = arith.constant 0 : i32
    %c0_i32_1 = arith.constant 0 : i32
    return %c0_i32, %c0_i32_0 : i32, i32
  }
  func.func @transform_21(%arg0: i32) -> (i32, i32) {
    %c0_i32 = arith.constant 0 : i32
    %c0_i32_0 = arith.constant 0 : i32
    %c0_i32_1 = arith.constant 0 : i32
    return %c0_i32, %c0_i32_0 : i32, i32
  }
  func.func @transform_22(%arg0: i32) -> (i32, i32) {
    %c0_i32 = arith.constant 0 : i32
    %c0_i32_0 = arith.constant 0 : i32
    %c0_i32_1 = arith.constant 0 : i32
    return %c0_i32, %c0_i32_0 : i32, i32
  }
  func.func @transform_23(%arg0: i32) -> (i32, i32, i32) {
    %c0_i32 = arith.constant 0 : i32
    %c0_i32_0 = arith.constant 0 : i32
    %c0_i32_1 = arith.constant 0 : i32
    return %arg0, %c0_i32, %c0_i32_0 : i32, i32, i32
  }
  func.func @transform_24(%arg0: i32) -> (i32, i32, i32) {
    %c0_i32 = arith.constant 0 : i32
    %c0_i32_0 = arith.constant 0 : i32
    %c0_i32_1 = arith.constant 0 : i32
    return %arg0, %c0_i32, %c0_i32_0 : i32, i32, i32
  }
}

</mosaic_0001>

<llo_original>
// kernel: tpu_custom_call.1
$region0: #{tpu_custom_call.1}
  #allocation0 [shape = 'u32[]', space=smem, size = 0x4, offset = 0x4, fixed_abs, tag = 'smem constant byte address 0x4 - core index']
  #allocation1 [shape = 'u32[72,128]{1,0:T(1,128)}', space=vmem, size = 0x9000, scoped, tag = 'internal scratch']
  %s0 = inlined_call_operand.vmem [shape: f32[2,8,32], index: 0, kind: input, shape index: {}]
  %s1 = inlined_call_operand.vmem [shape: f32[2,1,8], index: 1, kind: input, shape index: {}]
  %s2 = inlined_call_operand.vmem [shape: f32[2,8,8], index: 2, kind: input, shape index: {}]
  %s3 = inlined_call_operand.vmem [shape: f32[32,32], index: 3, kind: input, shape index: {}]
  %s4 = inlined_call_operand.vmem [shape: f32[1,32], index: 4, kind: input, shape index: {}]
  %s5 = inlined_call_operand.vmem [shape: f32[32,32], index: 5, kind: input, shape index: {}]
  %s6 = inlined_call_operand.vmem [shape: f32[1,32], index: 6, kind: input, shape index: {}]
  %s7 = inlined_call_operand.vmem [shape: f32[32,16], index: 7, kind: input, shape index: {}]
  %s8 = inlined_call_operand.vmem [shape: f32[1,16], index: 8, kind: input, shape index: {}]
  %s9 = inlined_call_operand.vmem [shape: f32[32,16], index: 9, kind: input, shape index: {}]
  %s10 = inlined_call_operand.vmem [shape: f32[1,16], index: 10, kind: input, shape index: {}]
  %s11 = inlined_call_operand.vmem [shape: f32[2,16,16], index: 11, kind: input, shape index: {}]
  %s12 = inlined_call_operand.vmem [shape: f32[2,16], index: 12, kind: input, shape index: {}]
  %s13 = inlined_call_operand.vmem [shape: f32[2,16,16], index: 13, kind: input, shape index: {}]
  %s14 = inlined_call_operand.vmem [shape: f32[2,16], index: 14, kind: input, shape index: {}]
  %s15 = inlined_call_operand.vmem [shape: f32[16,16], index: 15, kind: input, shape index: {}]
  %s16 = inlined_call_operand.vmem [shape: f32[1,16], index: 16, kind: input, shape index: {}]
  %s17 = inlined_call_operand.vmem [shape: f32[32,16], index: 17, kind: input, shape index: {}]
  %s18 = inlined_call_operand.vmem [shape: f32[1,16], index: 18, kind: input, shape index: {}]
  %s19 = inlined_call_operand.vmem [shape: f32[16,128], index: 19, kind: input, shape index: {}]
  %s20 = inlined_call_operand.vmem [shape: f32[1,128], index: 20, kind: input, shape index: {}]
  %s21 = inlined_call_operand.vmem [shape: f32[128,16], index: 21, kind: input, shape index: {}]
  %s22 = inlined_call_operand.vmem [shape: f32[1,16], index: 22, kind: input, shape index: {}]
  %s23 = inlined_call_operand.hbm [shape: f32[2,8,16], index: 23, kind: output, shape index: {0}]
  %s24 = inlined_call_operand.hbm [shape: f32[2,8,16], index: 24, kind: output, shape index: {1}]
  %25 = xla_tuple %s23, %s24
  %s26 = sld [smem:[#allocation0]]
  $region133: #{tpu_custom_call.1} parent=0
    _
  %s28 = ssub.s32 1, %s26
  %s29 = scalar_select 0, %s28, %s26
  $region1: #{tpu_custom_call.1} parent=0
    #allocation2 [shape = 'u8[8192]{0}', space=vmem, size = 0x2000, scoped, tag = 'output window, operand 0']
    #allocation3 [shape = 's32[2]{0}', space=sflag, size = 0x8, scoped, tag = 'scoped memory for tpu_custom_call.1']
    #allocation4 [shape = 'u8[8192]{0}', space=vmem, size = 0x2000, scoped, tag = 'output window, operand 1']
    #allocation5 [shape = 's32[2]{0}', space=sflag, size = 0x8, scoped, tag = 'scoped memory for tpu_custom_call.1']
    %30 = vsyncpa [#allocation3], 0
    %s31 = scalar_lea.sflag [#allocation3], 1
    %32 = vsyncpa %s31, 0
    %33 = vsyncpa [#allocation5], 0
    %s34 = scalar_lea.sflag [#allocation5], 1
    %35 = vsyncpa %s34, 0
    loop: start=0, step=1, limit=4
    $region2: #{tpu_custom_call.1} parent=1 // loop_pre_header
      _
    $region3: #{tpu_custom_call.1} parent=1 // loop_header
      %s37 = sphi 0, %s41
      %p38 = scmp.ge.s32.totalorder %s37, 4
      %s47 = sphi 0, %s49
      %s50 = sphi 0, %s47
      %s51 = sphi 0, %s50
      %s67 = sphi 0, %s51
      %s73 = sphi 0, %s75
      %s76 = sphi 0, %s73
      %s77 = sphi 0, %s76
      %s93 = sphi 0, %s77
      %s99 = sphi 0, %s101
      %s102 = sphi 0, %s99
      %s103 = sphi 0, %s102
      %s119 = sphi 0, %s103
      %s123 = sphi 0, %s123
      %s125 = sphi 0, %s123
      %s126 = sphi 0, %s125
      %s140 = sphi 0, %s126
      %s144 = sphi 0, %s144
      %s146 = sphi 0, %s144
      %s147 = sphi 0, %s146
      %s161 = sphi 0, %s147
      %s165 = sphi 0, %s165
      %s167 = sphi 0, %s165
      %s168 = sphi 0, %s167
      %s182 = sphi 0, %s168
      %s186 = sphi 0, %s186
      %s188 = sphi 0, %s186
      %s189 = sphi 0, %s188
      %s203 = sphi 0, %s189
      %s207 = sphi 0, %s207
      %s209 = sphi 0, %s207
      %s210 = sphi 0, %s209
      %s224 = sphi 0, %s210
      %s228 = sphi 0, %s228
      %s230 = sphi 0, %s228
      %s231 = sphi 0, %s230
      %s245 = sphi 0, %s231
      %s249 = sphi 0, %s249
      %s251 = sphi 0, %s249
      %s252 = sphi 0, %s251
      %s266 = sphi 0, %s252
      %s270 = sphi 0, %s270
      %s272 = sphi 0, %s270
      %s273 = sphi 0, %s272
      %s287 = sphi 0, %s273
      %s291 = sphi 0, %s291
      %s293 = sphi 0, %s291
      %s294 = sphi 0, %s293
      %s308 = sphi 0, %s294
      %s312 = sphi 0, %s312
      %s314 = sphi 0, %s312
      %s315 = sphi 0, %s314
      %s329 = sphi 0, %s315
      %s333 = sphi 0, %s333
      %s335 = sphi 0, %s333
      %s336 = sphi 0, %s335
      %s350 = sphi 0, %s336
      %s354 = sphi 0, %s354
      %s356 = sphi 0, %s354
      %s357 = sphi 0, %s356
      %s371 = sphi 0, %s357
      %s375 = sphi 0, %s375
      %s377 = sphi 0, %s375
      %s378 = sphi 0, %s377
      %s392 = sphi 0, %s378
      %s396 = sphi 0, %s396
      %s398 = sphi 0, %s396
      %s399 = sphi 0, %s398
      %s413 = sphi 0, %s399
      %s417 = sphi 0, %s417
      %s419 = sphi 0, %s417
      %s420 = sphi 0, %s419
      %s434 = sphi 0, %s420
      %s438 = sphi 0, %s438
      %s440 = sphi 0, %s438
      %s441 = sphi 0, %s440
      %s455 = sphi 0, %s441
      %s459 = sphi 0, %s459
      %s461 = sphi 0, %s459
      %s462 = sphi 0, %s461
      %s476 = sphi 0, %s462
      %s480 = sphi 0, %s480
      %s482 = sphi 0, %s480
      %s483 = sphi 0, %s482
      %s497 = sphi 0, %s483
      %s501 = sphi 0, %s501
      %s503 = sphi 0, %s501
      %s504 = sphi 0, %s503
      %s518 = sphi 0, %s504
      %s522 = sphi 0, %s522
      %s524 = sphi 0, %s522
      %s525 = sphi 0, %s524
      %s539 = sphi 0, %s525
      %s545 = sphi 0, %s547
      %s548 = sphi 0, %s545
      %s549 = sphi 0, %s548
      %s565 = sphi 0, %s549
      %s571 = sphi 0, %s573
      %s574 = sphi 0, %s571
      %s575 = sphi 0, %s574
      %s591 = sphi 0, %s575
    $region4: #{tpu_custom_call.1} parent=1 // loop_header_branch
      %40 = sbr.rel (%p38) target = $region8
    $region5: #{tpu_custom_call.1} parent=1 // loop_body
      %s42 = ssub.s32 %s37, 1
      %s43 = ssub.s32 %s37, 2
      %s44 = sadd.s32 %s37, 1
      %s45 = ssub.s32 %s37, %s44
      %p46 = scmp.eq.s32.totalorder %s45, 0
      %s48 = sadd.s32 %s47, 1
      %s49 = scalar_select %p46, %s47, %s48
      %p52 = pneg %p46
      %p53 = scmp.eq.s32.totalorder %s37, 1
      %p54 = por %p52, %p53
      %p55 = scmp.ne.s32.totalorder %s47, %s50
      %p56 = scmp.eq.s32.totalorder %s37, 0
      %p57 = por %p55, %p56
      %p58 = scmp.ne.s32.totalorder %s47, %s50
      %p59 = scmp.eq.s32.totalorder %s42, 1
      %p60 = por %p58, %p59
      %p61 = scmp.ne.s32.totalorder %s50, %s51
      %p62 = scmp.eq.s32.totalorder %s42, 0
      %p63 = por %p61, %p62
      %p64 = scmp.ne.s32.totalorder %s50, %s51
      %p65 = scmp.eq.s32.totalorder %s43, 1
      %p66 = por %p64, %p65
      %p68 = scmp.ne.s32.totalorder %s51, %s67
      %p69 = scmp.eq.s32.totalorder %s43, 0
      %p70 = por %p68, %p69
      %s71 = ssub.s32 %s37, %s44
      %p72 = scmp.eq.s32.totalorder %s71, 0
      %s74 = sadd.s32 %s73, 1
      %s75 = scalar_select %p72, %s73, %s74
      %p78 = pneg %p72
      %p79 = scmp.eq.s32.totalorder %s37, 1
      %p80 = por %p78, %p79
      %p81 = scmp.ne.s32.totalorder %s73, %s76
      %p82 = scmp.eq.s32.totalorder %s37, 0
      %p83 = por %p81, %p82
      %p84 = scmp.ne.s32.totalorder %s73, %s76
      %p85 = scmp.eq.s32.totalorder %s42, 1
      %p86 = por %p84, %p85
      %p87 = scmp.ne.s32.totalorder %s76, %s77
      %p88 = scmp.eq.s32.totalorder %s42, 0
      %p89 = por %p87, %p88
      %p90 = scmp.ne.s32.totalorder %s76, %s77
      %p91 = scmp.eq.s32.totalorder %s43, 1
      %p92 = por %p90, %p91
      %p94 = scmp.ne.s32.totalorder %s77, %s93
      %p95 = scmp.eq.s32.totalorder %s43, 0
      %p96 = por %p94, %p95
      %s97 = ssub.s32 %s37, %s44
      %p98 = scmp.eq.s32.totalorder %s97, 0
      %s100 = sadd.s32 %s99, 1
      %s101 = scalar_select %p98, %s99, %s100
      %p104 = pneg %p98
      %p105 = scmp.eq.s32.totalorder %s37, 1
      %p106 = por %p104, %p105
      %p107 = scmp.ne.s32.totalorder %s99, %s102
      %p108 = scmp.eq.s32.totalorder %s37, 0
      %p109 = por %p107, %p108
      %p110 = scmp.ne.s32.totalorder %s99, %s102
      %p111 = scmp.eq.s32.totalorder %s42, 1
      %p112 = por %p110, %p111
      %p113 = scmp.ne.s32.totalorder %s102, %s103
      %p114 = scmp.eq.s32.totalorder %s42, 0
      %p115 = por %p113, %p114
      %p116 = scmp.ne.s32.totalorder %s102, %s103
      %p117 = scmp.eq.s32.totalorder %s43, 1
      %p118 = por %p116, %p117
      %p120 = scmp.ne.s32.totalorder %s103, %s119
      %p121 = scmp.eq.s32.totalorder %s43, 0
      %p122 = por %p120, %p121
      %s124 = sadd.s32 %s123, 1
      %p127 = scmp.eq.s32.totalorder %s37, 1
      %p128 = scmp.ne.s32.totalorder %s123, %s125
      %p129 = scmp.eq.s32.totalorder %s37, 0
      %p130 = por %p128, %p129
      %p131 = scmp.ne.s32.totalorder %s123, %s125
      %p132 = scmp.eq.s32.totalorder %s42, 1
      %p133 = por %p131, %p132
      %p134 = scmp.ne.s32.totalorder %s125, %s126
      %p135 = scmp.eq.s32.totalorder %s42, 0
      %p136 = por %p134, %p135
      %p137 = scmp.ne.s32.totalorder %s125, %s126
      %p138 = scmp.eq.s32.totalorder %s43, 1
      %p139 = por %p137, %p138
      %p141 = scmp.ne.s32.totalorder %s126, %s140
      %p142 = scmp.eq.s32.totalorder %s43, 0
      %p143 = por %p141, %p142
      %s145 = sadd.s32 %s144, 1
      %p148 = scmp.eq.s32.totalorder %s37, 1
      %p149 = scmp.ne.s32.totalorder %s144, %s146
      %p150 = scmp.eq.s32.totalorder %s37, 0
      %p151 = por %p149, %p150
      %p152 = scmp.ne.s32.totalorder %s144, %s146
      %p153 = scmp.eq.s32.totalorder %s42, 1
      %p154 = por %p152, %p153
      %p155 = scmp.ne.s32.totalorder %s146, %s147
      %p156 = scmp.eq.s32.totalorder %s42, 0
      %p157 = por %p155, %p156
      %p158 = scmp.ne.s32.totalorder %s146, %s147
      %p159 = scmp.eq.s32.totalorder %s43, 1
      %p160 = por %p158, %p159
      %p162 = scmp.ne.s32.totalorder %s147, %s161
      %p163 = scmp.eq.s32.totalorder %s43, 0
      %p164 = por %p162, %p163
      %s166 = sadd.s32 %s165, 1
      %p169 = scmp.eq.s32.totalorder %s37, 1
      %p170 = scmp.ne.s32.totalorder %s165, %s167
      %p171 = scmp.eq.s32.totalorder %s37, 0
      %p172 = por %p170, %p171
      %p173 = scmp.ne.s32.totalorder %s165, %s167
      %p174 = scmp.eq.s32.totalorder %s42, 1
      %p175 = por %p173, %p174
      %p176 = scmp.ne.s32.totalorder %s167, %s168
      %p177 = scmp.eq.s32.totalorder %s42, 0
      %p178 = por %p176, %p177
      %p179 = scmp.ne.s32.totalorder %s167, %s168
      %p180 = scmp.eq.s32.totalorder %s43, 1
      %p181 = por %p179, %p180
      %p183 = scmp.ne.s32.totalorder %s168, %s182
      %p184 = scmp.eq.s32.totalorder %s43, 0
      %p185 = por %p183, %p184
      %s187 = sadd.s32 %s186, 1
      %p190 = scmp.eq.s32.totalorder %s37, 1
      %p191 = scmp.ne.s32.totalorder %s186, %s188
      %p192 = scmp.eq.s32.totalorder %s37, 0
      %p193 = por %p191, %p192
      %p194 = scmp.ne.s32.totalorder %s186, %s188
      %p195 = scmp.eq.s32.totalorder %s42, 1
      %p196 = por %p194, %p195
      %p197 = scmp.ne.s32.totalorder %s188, %s189
      %p198 = scmp.eq.s32.totalorder %s42, 0
      %p199 = por %p197, %p198
      %p200 = scmp.ne.s32.totalorder %s188, %s189
      %p201 = scmp.eq.s32.totalorder %s43, 1
      %p202 = por %p200, %p201
      %p204 = scmp.ne.s32.totalorder %s189, %s203
      %p205 = scmp.eq.s32.totalorder %s43, 0
      %p206 = por %p204, %p205
      %s208 = sadd.s32 %s207, 1
      %p211 = scmp.eq.s32.totalorder %s37, 1
      %p212 = scmp.ne.s32.totalorder %s207, %s209
      %p213 = scmp.eq.s32.totalorder %s37, 0
      %p214 = por %p212, %p213
      %p215 = scmp.ne.s32.totalorder %s207, %s209
      %p216 = scmp.eq.s32.totalorder %s42, 1
      %p217 = por %p215, %p216
      %p218 = scmp.ne.s32.totalorder %s209, %s210
      %p219 = scmp.eq.s32.totalorder %s42, 0
      %p220 = por %p218, %p219
      %p221 = scmp.ne.s32.totalorder %s209, %s210
      %p222 = scmp.eq.s32.totalorder %s43, 1
      %p223 = por %p221, %p222
      %p225 = scmp.ne.s32.totalorder %s210, %s224
      %p226 = scmp.eq.s32.totalorder %s43, 0
      %p227 = por %p225, %p226
      %s229 = sadd.s32 %s228, 1
      %p232 = scmp.eq.s32.totalorder %s37, 1
      %p233 = scmp.ne.s32.totalorder %s228, %s230
      %p234 = scmp.eq.s32.totalorder %s37, 0
      %p235 = por %p233, %p234
      %p236 = scmp.ne.s32.totalorder %s228, %s230
      %p237 = scmp.eq.s32.totalorder %s42, 1
      %p238 = por %p236, %p237
      %p239 = scmp.ne.s32.totalorder %s230, %s231
      %p240 = scmp.eq.s32.totalorder %s42, 0
      %p241 = por %p239, %p240
      %p242 = scmp.ne.s32.totalorder %s230, %s231
      %p243 = scmp.eq.s32.totalorder %s43, 1
      %p244 = por %p242, %p243
      %p246 = scmp.ne.s32.totalorder %s231, %s245
      %p247 = scmp.eq.s32.totalorder %s43, 0
      %p248 = por %p246, %p247
      %s250 = sadd.s32 %s249, 1
      %p253 = scmp.eq.s32.totalorder %s37, 1
      %p254 = scmp.ne.s32.totalorder %s249, %s251
      %p255 = scmp.eq.s32.totalorder %s37, 0
      %p256 = por %p254, %p255
      %p257 = scmp.ne.s32.totalorder %s249, %s251
      %p258 = scmp.eq.s32.totalorder %s42, 1
      %p259 = por %p257, %p258
      %p260 = scmp.ne.s32.totalorder %s251, %s252
      %p261 = scmp.eq.s32.totalorder %s42, 0
      %p262 = por %p260, %p261
      %p263 = scmp.ne.s32.totalorder %s251, %s252
      %p264 = scmp.eq.s32.totalorder %s43, 1
      %p265 = por %p263, %p264
      %p267 = scmp.ne.s32.totalorder %s252, %s266
      %p268 = scmp.eq.s32.totalorder %s43, 0
      %p269 = por %p267, %p268
      %s271 = sadd.s32 %s270, 1
      %p274 = scmp.eq.s32.totalorder %s37, 1
      %p275 = scmp.ne.s32.totalorder %s270, %s272
      %p276 = scmp.eq.s32.totalorder %s37, 0
      %p277 = por %p275, %p276
      %p278 = scmp.ne.s32.totalorder %s270, %s272
      %p279 = scmp.eq.s32.totalorder %s42, 1
      %p280 = por %p278, %p279
      %p281 = scmp.ne.s32.totalorder %s272, %s273
      %p282 = scmp.eq.s32.totalorder %s42, 0
      %p283 = por %p281, %p282
      %p284 = scmp.ne.s32.totalorder %s272, %s273
      %p285 = scmp.eq.s32.totalorder %s43, 1
      %p286 = por %p284, %p285
      %p288 = scmp.ne.s32.totalorder %s273, %s287
      %p289 = scmp.eq.s32.totalorder %s43, 0
      %p290 = por %p288, %p289
      %s292 = sadd.s32 %s291, 1
      %p295 = scmp.eq.s32.totalorder %s37, 1
      %p296 = scmp.ne.s32.totalorder %s291, %s293
      %p297 = scmp.eq.s32.totalorder %s37, 0
      %p298 = por %p296, %p297
      %p299 = scmp.ne.s32.totalorder %s291, %s293
      %p300 = scmp.eq.s32.totalorder %s42, 1
      %p301 = por %p299, %p300
      %p302 = scmp.ne.s32.totalorder %s293, %s294
      %p303 = scmp.eq.s32.totalorder %s42, 0
      %p304 = por %p302, %p303
      %p305 = scmp.ne.s32.totalorder %s293, %s294
      %p306 = scmp.eq.s32.totalorder %s43, 1
      %p307 = por %p305, %p306
      %p309 = scmp.ne.s32.totalorder %s294, %s308
      %p310 = scmp.eq.s32.totalorder %s43, 0
      %p311 = por %p309, %p310
      %s313 = sadd.s32 %s312, 1
      %p316 = scmp.eq.s32.totalorder %s37, 1
      %p317 = scmp.ne.s32.totalorder %s312, %s314
      %p318 = scmp.eq.s32.totalorder %s37, 0
      %p319 = por %p317, %p318
      %p320 = scmp.ne.s32.totalorder %s312, %s314
      %p321 = scmp.eq.s32.totalorder %s42, 1
      %p322 = por %p320, %p321
      %p323 = scmp.ne.s32.totalorder %s314, %s315
      %p324 = scmp.eq.s32.totalorder %s42, 0
      %p325 = por %p323, %p324
      %p326 = scmp.ne.s32.totalorder %s314, %s315
      %p327 = scmp.eq.s32.totalorder %s43, 1
      %p328 = por %p326, %p327
      %p330 = scmp.ne.s32.totalorder %s315, %s329
      %p331 = scmp.eq.s32.totalorder %s43, 0
      %p332 = por %p330, %p331
      %s334 = sadd.s32 %s333, 1
      %p337 = scmp.eq.s32.totalorder %s37, 1
      %p338 = scmp.ne.s32.totalorder %s333, %s335
      %p339 = scmp.eq.s32.totalorder %s37, 0
      %p340 = por %p338, %p339
      %p341 = scmp.ne.s32.totalorder %s333, %s335
      %p342 = scmp.eq.s32.totalorder %s42, 1
      %p343 = por %p341, %p342
      %p344 = scmp.ne.s32.totalorder %s335, %s336
      %p345 = scmp.eq.s32.totalorder %s42, 0
      %p346 = por %p344, %p345
      %p347 = scmp.ne.s32.totalorder %s335, %s336
      %p348 = scmp.eq.s32.totalorder %s43, 1
      %p349 = por %p347, %p348
      %p351 = scmp.ne.s32.totalorder %s336, %s350
      %p352 = scmp.eq.s32.totalorder %s43, 0
      %p353 = por %p351, %p352
      %s355 = sadd.s32 %s354, 1
      %p358 = scmp.eq.s32.totalorder %s37, 1
      %p359 = scmp.ne.s32.totalorder %s354, %s356
      %p360 = scmp.eq.s32.totalorder %s37, 0
      %p361 = por %p359, %p360
      %p362 = scmp.ne.s32.totalorder %s354, %s356
      %p363 = scmp.eq.s32.totalorder %s42, 1
      %p364 = por %p362, %p363
      %p365 = scmp.ne.s32.totalorder %s356, %s357
      %p366 = scmp.eq.s32.totalorder %s42, 0
      %p367 = por %p365, %p366
      %p368 = scmp.ne.s32.totalorder %s356, %s357
      %p369 = scmp.eq.s32.totalorder %s43, 1
      %p370 = por %p368, %p369
      %p372 = scmp.ne.s32.totalorder %s357, %s371
      %p373 = scmp.eq.s32.totalorder %s43, 0
      %p374 = por %p372, %p373
      %s376 = sadd.s32 %s375, 1
      %p379 = scmp.eq.s32.totalorder %s37, 1
      %p380 = scmp.ne.s32.totalorder %s375, %s377
      %p381 = scmp.eq.s32.totalorder %s37, 0
      %p382 = por %p380, %p381
      %p383 = scmp.ne.s32.totalorder %s375, %s377
      %p384 = scmp.eq.s32.totalorder %s42, 1
      %p385 = por %p383, %p384
      %p386 = scmp.ne.s32.totalorder %s377, %s378
      %p387 = scmp.eq.s32.totalorder %s42, 0
      %p388 = por %p386, %p387
      %p389 = scmp.ne.s32.totalorder %s377, %s378
      %p390 = scmp.eq.s32.totalorder %s43, 1
      %p391 = por %p389, %p390
      %p393 = scmp.ne.s32.totalorder %s378, %s392
      %p394 = scmp.eq.s32.totalorder %s43, 0
      %p395 = por %p393, %p394
      %s397 = sadd.s32 %s396, 1
      %p400 = scmp.eq.s32.totalorder %s37, 1
      %p401 = scmp.ne.s32.totalorder %s396, %s398
      %p402 = scmp.eq.s32.totalorder %s37, 0
      %p403 = por %p401, %p402
      %p404 = scmp.ne.s32.totalorder %s396, %s398
      %p405 = scmp.eq.s32.totalorder %s42, 1
      %p406 = por %p404, %p405
      %p407 = scmp.ne.s32.totalorder %s398, %s399
      %p408 = scmp.eq.s32.totalorder %s42, 0
      %p409 = por %p407, %p408
      %p410 = scmp.ne.s32.totalorder %s398, %s399
      %p411 = scmp.eq.s32.totalorder %s43, 1
      %p412 = por %p410, %p411
      %p414 = scmp.ne.s32.totalorder %s399, %s413
      %p415 = scmp.eq.s32.totalorder %s43, 0
      %p416 = por %p414, %p415
      %s418 = sadd.s32 %s417, 1
      %p421 = scmp.eq.s32.totalorder %s37, 1
      %p422 = scmp.ne.s32.totalorder %s417, %s419
      %p423 = scmp.eq.s32.totalorder %s37, 0
      %p424 = por %p422, %p423
      %p425 = scmp.ne.s32.totalorder %s417, %s419
      %p426 = scmp.eq.s32.totalorder %s42, 1
      %p427 = por %p425, %p426
      %p428 = scmp.ne.s32.totalorder %s419, %s420
      %p429 = scmp.eq.s32.totalorder %s42, 0
      %p430 = por %p428, %p429
      %p431 = scmp.ne.s32.totalorder %s419, %s420
      %p432 = scmp.eq.s32.totalorder %s43, 1
      %p433 = por %p431, %p432
      %p435 = scmp.ne.s32.totalorder %s420, %s434
      %p436 = scmp.eq.s32.totalorder %s43, 0
      %p437 = por %p435, %p436
      %s439 = sadd.s32 %s438, 1
      %p442 = scmp.eq.s32.totalorder %s37, 1
      %p443 = scmp.ne.s32.totalorder %s438, %s440
      %p444 = scmp.eq.s32.totalorder %s37, 0
      %p445 = por %p443, %p444
      %p446 = scmp.ne.s32.totalorder %s438, %s440
      %p447 = scmp.eq.s32.totalorder %s42, 1
      %p448 = por %p446, %p447
      %p449 = scmp.ne.s32.totalorder %s440, %s441
      %p450 = scmp.eq.s32.totalorder %s42, 0
      %p451 = por %p449, %p450
      %p452 = scmp.ne.s32.totalorder %s440, %s441
      %p453 = scmp.eq.s32.totalorder %s43, 1
      %p454 = por %p452, %p453
      %p456 = scmp.ne.s32.totalorder %s441, %s455
      %p457 = scmp.eq.s32.totalorder %s43, 0
      %p458 = por %p456, %p457
      %s460 = sadd.s32 %s459, 1
      %p463 = scmp.eq.s32.totalorder %s37, 1
      %p464 = scmp.ne.s32.totalorder %s459, %s461
      %p465 = scmp.eq.s32.totalorder %s37, 0
      %p466 = por %p464, %p465
      %p467 = scmp.ne.s32.totalorder %s459, %s461
      %p468 = scmp.eq.s32.totalorder %s42, 1
      %p469 = por %p467, %p468
      %p470 = scmp.ne.s32.totalorder %s461, %s462
      %p471 = scmp.eq.s32.totalorder %s42, 0
      %p472 = por %p470, %p471
      %p473 = scmp.ne.s32.totalorder %s461, %s462
      %p474 = scmp.eq.s32.totalorder %s43, 1
      %p475 = por %p473, %p474
      %p477 = scmp.ne.s32.totalorder %s462, %s476
      %p478 = scmp.eq.s32.totalorder %s43, 0
      %p479 = por %p477, %p478
      %s481 = sadd.s32 %s480, 1
      %p484 = scmp.eq.s32.totalorder %s37, 1
      %p485 = scmp.ne.s32.totalorder %s480, %s482
      %p486 = scmp.eq.s32.totalorder %s37, 0
      %p487 = por %p485, %p486
      %p488 = scmp.ne.s32.totalorder %s480, %s482
      %p489 = scmp.eq.s32.totalorder %s42, 1
      %p490 = por %p488, %p489
      %p491 = scmp.ne.s32.totalorder %s482, %s483
      %p492 = scmp.eq.s32.totalorder %s42, 0
      %p493 = por %p491, %p492
      %p494 = scmp.ne.s32.totalorder %s482, %s483
      %p495 = scmp.eq.s32.totalorder %s43, 1
      %p496 = por %p494, %p495
      %p498 = scmp.ne.s32.totalorder %s483, %s497
      %p499 = scmp.eq.s32.totalorder %s43, 0
      %p500 = por %p498, %p499
      %s502 = sadd.s32 %s501, 1
      %p505 = scmp.eq.s32.totalorder %s37, 1
      %p506 = scmp.ne.s32.totalorder %s501, %s503
      %p507 = scmp.eq.s32.totalorder %s37, 0
      %p508 = por %p506, %p507
      %p509 = scmp.ne.s32.totalorder %s501, %s503
      %p510 = scmp.eq.s32.totalorder %s42, 1
      %p511 = por %p509, %p510
      %p512 = scmp.ne.s32.totalorder %s503, %s504
      %p513 = scmp.eq.s32.totalorder %s42, 0
      %p514 = por %p512, %p513
      %p515 = scmp.ne.s32.totalorder %s503, %s504
      %p516 = scmp.eq.s32.totalorder %s43, 1
      %p517 = por %p515, %p516
      %p519 = scmp.ne.s32.totalorder %s504, %s518
      %p520 = scmp.eq.s32.totalorder %s43, 0
      %p521 = por %p519, %p520
      %s523 = sadd.s32 %s522, 1
      %p526 = scmp.eq.s32.totalorder %s37, 1
      %p527 = scmp.ne.s32.totalorder %s522, %s524
      %p528 = scmp.eq.s32.totalorder %s37, 0
      %p529 = por %p527, %p528
      %p530 = scmp.ne.s32.totalorder %s522, %s524
      %p531 = scmp.eq.s32.totalorder %s42, 1
      %p532 = por %p530, %p531
      %p533 = scmp.ne.s32.totalorder %s524, %s525
      %p534 = scmp.eq.s32.totalorder %s42, 0
      %p535 = por %p533, %p534
      %p536 = scmp.ne.s32.totalorder %s524, %s525
      %p537 = scmp.eq.s32.totalorder %s43, 1
      %p538 = por %p536, %p537
      %p540 = scmp.ne.s32.totalorder %s525, %s539
      %p541 = scmp.eq.s32.totalorder %s43, 0
      %p542 = por %p540, %p541
      %s543 = ssub.s32 %s37, %s44
      %p544 = scmp.eq.s32.totalorder %s543, 0
      %s546 = sadd.s32 %s545, 1
      %s547 = scalar_select %p544, %s545, %s546
      %p550 = pneg %p544
      %p551 = scmp.eq.s32.totalorder %s37, 1
      %p552 = por %p550, %p551
      %p553 = scmp.ne.s32.totalorder %s545, %s548
      %p554 = scmp.eq.s32.totalorder %s37, 0
      %p555 = por %p553, %p554
      %p556 = scmp.ne.s32.totalorder %s545, %s548
      %p557 = scmp.eq.s32.totalorder %s42, 1
      %p558 = por %p556, %p557
      %p559 = scmp.ne.s32.totalorder %s548, %s549
      %p560 = scmp.eq.s32.totalorder %s42, 0
      %p561 = por %p559, %p560
      %p562 = scmp.ne.s32.totalorder %s548, %s549
      %p563 = scmp.eq.s32.totalorder %s43, 1
      %p564 = por %p562, %p563
      %p566 = scmp.ne.s32.totalorder %s549, %s565
      %p567 = scmp.eq.s32.totalorder %s43, 0
      %p568 = por %p566, %p567
      %s569 = ssub.s32 %s37, %s44
      %p570 = scmp.eq.s32.totalorder %s569, 0
      %s572 = sadd.s32 %s571, 1
      %s573 = scalar_select %p570, %s571, %s572
      %p576 = pneg %p570
      %p577 = scmp.eq.s32.totalorder %s37, 1
      %p578 = por %p576, %p577
      %p579 = scmp.ne.s32.totalorder %s571, %s574
      %p580 = scmp.eq.s32.totalorder %s37, 0
      %p581 = por %p579, %p580
      %p582 = scmp.ne.s32.totalorder %s571, %s574
      %p583 = scmp.eq.s32.totalorder %s42, 1
      %p584 = por %p582, %p583
      %p585 = scmp.ne.s32.totalorder %s574, %s575
      %p586 = scmp.eq.s32.totalorder %s42, 0
      %p587 = por %p585, %p586
      %p588 = scmp.ne.s32.totalorder %s574, %s575
      %p589 = scmp.eq.s32.totalorder %s43, 1
      %p590 = por %p588, %p589
      %p592 = scmp.ne.s32.totalorder %s575, %s591
      %p593 = scmp.eq.s32.totalorder %s43, 0
      %p594 = por %p592, %p593
      %p595 = scmp.le.s32.totalorder 1, %s37
      %p596 = scmp.lt.s32.totalorder %s37, 3
      %p597 = pnand %p595, %p596
      %p598 = pneg %p597
      // Predicated region
      $region9: #{tpu_custom_call.1} parent=5 // pred_check
        _
      $region10: #{tpu_custom_call.1} parent=5 // pred_check_branch
        %600 = sbr.rel (%p597) target = $region12
      $region11: #{tpu_custom_call.1} parent=5 // pred_region
        %s601 = ssub.s32 %s37, 1
        // Predicated region
        $region13: #{tpu_custom_call.1} parent=11 // pred_check
          %p602 = pneg %p136
        $region14: #{tpu_custom_call.1} parent=11 // pred_check_branch
          %604 = sbr.rel (%p602) target = $region16
        $region15: #{tpu_custom_call.1} parent=11 // pred_region
          _
        $region16: #{tpu_custom_call.1} parent=11 // pred_fallthru
          _
        // Predicated region
        $region17: #{tpu_custom_call.1} parent=11 // pred_check
          %p605 = pneg %p157
        $region18: #{tpu_custom_call.1} parent=11 // pred_check_branch
          %607 = sbr.rel (%p605) target = $region20
        $region19: #{tpu_custom_call.1} parent=11 // pred_region
          _
        $region20: #{tpu_custom_call.1} parent=11 // pred_fallthru
          _
        // Predicated region
        $region21: #{tpu_custom_call.1} parent=11 // pred_check
          %p608 = pneg %p178
        $region22: #{tpu_custom_call.1} parent=11 // pred_check_branch
          %610 = sbr.rel (%p608) target = $region24
        $region23: #{tpu_custom_call.1} parent=11 // pred_region
          _
        $region24: #{tpu_custom_call.1} parent=11 // pred_fallthru
          _
        // Predicated region
        $region25: #{tpu_custom_call.1} parent=11 // pred_check
          %p611 = pneg %p199
        $region26: #{tpu_custom_call.1} parent=11 // pred_check_branch
          %613 = sbr.rel (%p611) target = $region28
        $region27: #{tpu_custom_call.1} parent=11 // pred_region
          _
        $region28: #{tpu_custom_call.1} parent=11 // pred_fallthru
          _
        // Predicated region
        $region29: #{tpu_custom_call.1} parent=11 // pred_check
          %p614 = pneg %p220
        $region30: #{tpu_custom_call.1} parent=11 // pred_check_branch
          %616 = sbr.rel (%p614) target = $region32
        $region31: #{tpu_custom_call.1} parent=11 // pred_region
          _
        $region32: #{tpu_custom_call.1} parent=11 // pred_fallthru
          _
        // Predicated region
        $region33: #{tpu_custom_call.1} parent=11 // pred_check
          %p617 = pneg %p241
        $region34: #{tpu_custom_call.1} parent=11 // pred_check_branch
          %619 = sbr.rel (%p617) target = $region36
        $region35: #{tpu_custom_call.1} parent=11 // pred_region
          _
        $region36: #{tpu_custom_call.1} parent=11 // pred_fallthru
          _
        // Predicated region
        $region37: #{tpu_custom_call.1} parent=11 // pred_check
          %p620 = pneg %p262
        $region38: #{tpu_custom_call.1} parent=11 // pred_check_branch
          %622 = sbr.rel (%p620) target = $region40
        $region39: #{tpu_custom_call.1} parent=11 // pred_region
          _
        $region40: #{tpu_custom_call.1} parent=11 // pred_fallthru
          _
        // Predicated region
        $region41: #{tpu_custom_call.1} parent=11 // pred_check
          %p623 = pneg %p283
        $region42: #{tpu_custom_call.1} parent=11 // pred_check_branch
          %625 = sbr.rel (%p623) target = $region44
        $region43: #{tpu_custom_call.1} parent=11 // pred_region
          _
        $region44: #{tpu_custom_call.1} parent=11 // pred_fallthru
          _
        // Predicated region
        $region45: #{tpu_custom_call.1} parent=11 // pred_check
          %p626 = pneg %p304
        $region46: #{tpu_custom_call.1} parent=11 // pred_check_branch
          %628 = sbr.rel (%p626) target = $region48
        $region47: #{tpu_custom_call.1} parent=11 // pred_region
          _
        $region48: #{tpu_custom_call.1} parent=11 // pred_fallthru
          _
        // Predicated region
        $region49: #{tpu_custom_call.1} parent=11 // pred_check
          %p629 = pneg %p325
        $region50: #{tpu_custom_call.1} parent=11 // pred_check_branch
          %631 = sbr.rel (%p629) target = $region52
        $region51: #{tpu_custom_call.1} parent=11 // pred_region
          _
        $region52: #{tpu_custom_call.1} parent=11 // pred_fallthru
          _
        // Predicated region
        $region53: #{tpu_custom_call.1} parent=11 // pred_check
          %p632 = pneg %p346
        $region54: #{tpu_custom_call.1} parent=11 // pred_check_branch
          %634 = sbr.rel (%p632) target = $region56
        $region55: #{tpu_custom_call.1} parent=11 // pred_region
          _
        $region56: #{tpu_custom_call.1} parent=11 // pred_fallthru
          _
        // Predicated region
        $region57: #{tpu_custom_call.1} parent=11 // pred_check
          %p635 = pneg %p367
        $region58: #{tpu_custom_call.1} parent=11 // pred_check_branch
          %637 = sbr.rel (%p635) target = $region60
        $region59: #{tpu_custom_call.1} parent=11 // pred_region
          _
        $region60: #{tpu_custom_call.1} parent=11 // pred_fallthru
          _
        // Predicated region
        $region61: #{tpu_custom_call.1} parent=11 // pred_check
          %p638 = pneg %p388
        $region62: #{tpu_custom_call.1} parent=11 // pred_check_branch
          %640 = sbr.rel (%p638) target = $region64
        $region63: #{tpu_custom_call.1} parent=11 // pred_region
          _
        $region64: #{tpu_custom_call.1} parent=11 // pred_fallthru
          _
        // Predicated region
        $region65: #{tpu_custom_call.1} parent=11 // pred_check
          %p641 = pneg %p409
        $region66: #{tpu_custom_call.1} parent=11 // pred_check_branch
          %643 = sbr.rel (%p641) target = $region68
        $region67: #{tpu_custom_call.1} parent=11 // pred_region
          _
        $region68: #{tpu_custom_call.1} parent=11 // pred_fallthru
          _
        // Predicated region
        $region69: #{tpu_custom_call.1} parent=11 // pred_check
          %p644 = pneg %p430
        $region70: #{tpu_custom_call.1} parent=11 // pred_check_branch
          %646 = sbr.rel (%p644) target = $region72
        $region71: #{tpu_custom_call.1} parent=11 // pred_region
          _
        $region72: #{tpu_custom_call.1} parent=11 // pred_fallthru
          _
        // Predicated region
        $region73: #{tpu_custom_call.1} parent=11 // pred_check
          %p647 = pneg %p451
        $region74: #{tpu_custom_call.1} parent=11 // pred_check_branch
          %649 = sbr.rel (%p647) target = $region76
        $region75: #{tpu_custom_call.1} parent=11 // pred_region
          _
        $region76: #{tpu_custom_call.1} parent=11 // pred_fallthru
          _
        // Predicated region
        $region77: #{tpu_custom_call.1} parent=11 // pred_check
          %p650 = pneg %p472
        $region78: #{tpu_custom_call.1} parent=11 // pred_check_branch
          %652 = sbr.rel (%p650) target = $region80
        $region79: #{tpu_custom_call.1} parent=11 // pred_region
          _
        $region80: #{tpu_custom_call.1} parent=11 // pred_fallthru
          _
        // Predicated region
        $region81: #{tpu_custom_call.1} parent=11 // pred_check
          %p653 = pneg %p493
        $region82: #{tpu_custom_call.1} parent=11 // pred_check_branch
          %655 = sbr.rel (%p653) target = $region84
        $region83: #{tpu_custom_call.1} parent=11 // pred_region
          _
        $region84: #{tpu_custom_call.1} parent=11 // pred_fallthru
          _
        // Predicated region
        $region85: #{tpu_custom_call.1} parent=11 // pred_check
          %p656 = pneg %p514
        $region86: #{tpu_custom_call.1} parent=11 // pred_check_branch
          %658 = sbr.rel (%p656) target = $region88
        $region87: #{tpu_custom_call.1} parent=11 // pred_region
          _
        $region88: #{tpu_custom_call.1} parent=11 // pred_fallthru
          _
        // Predicated region
        $region89: #{tpu_custom_call.1} parent=11 // pred_check
          %p659 = pneg %p535
        $region90: #{tpu_custom_call.1} parent=11 // pred_check_branch
          %661 = sbr.rel (%p659) target = $region92
        $region91: #{tpu_custom_call.1} parent=11 // pred_region
          _
        $region92: #{tpu_custom_call.1} parent=11 // pred_fallthru
          _
      $region12: #{tpu_custom_call.1} parent=5 // pred_fallthru
        _
      %p662 = scmp.lt.s32.totalorder %s37, 2
      // Predicated region
      $region93: #{tpu_custom_call.1} parent=5 // pred_check
        %p663 = pneg %p662
      $region94: #{tpu_custom_call.1} parent=5 // pred_check_branch
        %665 = sbr.rel (%p663) target = $region96
      $region95: #{tpu_custom_call.1} parent=5 // pred_region
        // Predicated region
        $region97: #{tpu_custom_call.1} parent=95 // pred_check
          %p666 = pneg %p57
        $region98: #{tpu_custom_call.1} parent=95 // pred_check_branch
          %668 = sbr.rel (%p666) target = $region100
        $region99: #{tpu_custom_call.1} parent=95 // pred_region
          %p669 = scmp.lt.s32.totalorder %s37, 1
          %s670 = scalar_select %p669, %s37, 1
          %s671 = smul.addr %s670, 8
          %s672 = scalar_lea.vmem %s0, %s671
        $region100: #{tpu_custom_call.1} parent=95 // pred_fallthru
          _
        // Predicated region
        $region101: #{tpu_custom_call.1} parent=95 // pred_check
          %p673 = pneg %p83
        $region102: #{tpu_custom_call.1} parent=95 // pred_check_branch
          %675 = sbr.rel (%p673) target = $region104
        $region103: #{tpu_custom_call.1} parent=95 // pred_region
          %p676 = scmp.lt.s32.totalorder %s37, 1
          %s677 = scalar_select %p676, %s37, 1
          %s678 = scalar_lea.vmem %s1, %s677
        $region104: #{tpu_custom_call.1} parent=95 // pred_fallthru
          _
        // Predicated region
        $region105: #{tpu_custom_call.1} parent=95 // pred_check
          %p679 = pneg %p109
        $region106: #{tpu_custom_call.1} parent=95 // pred_check_branch
          %681 = sbr.rel (%p679) target = $region108
        $region107: #{tpu_custom_call.1} parent=95 // pred_region
          %p682 = scmp.lt.s32.totalorder %s37, 1
          %s683 = scalar_select %p682, %s37, 1
          %s684 = smul.addr %s683, 8
          %s685 = scalar_lea.vmem %s2, %s684
        $region108: #{tpu_custom_call.1} parent=95 // pred_fallthru
          _
      $region96: #{tpu_custom_call.1} parent=5 // pred_fallthru
        _
      %p686 = scmp.le.s32.totalorder 1, %s37
      %p687 = scmp.lt.s32.totalorder %s37, 3
      %p688 = pnand %p686, %p687
      %p689 = pneg %p688
      // Predicated region
      $region109: #{tpu_custom_call.1} parent=5 // pred_check
        _
      $region110: #{tpu_custom_call.1} parent=5 // pred_check_branch
        %691 = sbr.rel (%p688) target = $region112
      $region111: #{tpu_custom_call.1} parent=5 // pred_region
        %s692 = ssub.s32 %s37, 1
        %p693 = scmp.lt.s32.totalorder %s42, 1
        %s694 = scalar_select %p693, %s42, 1
        %s695 = smul.addr %s694, 8
        %s696 = scalar_lea.vmem %s0, %s695
        %p697 = pneg %p63
        %p698 = pneg %p60
        %p699 = scmp.lt.s32.totalorder %s42, 1
        %s700 = scalar_select %p699, %s42, 1
        %s701 = scalar_lea.vmem %s1, %s700
        %p702 = pneg %p89
        %p703 = pneg %p86
        %p704 = scmp.lt.s32.totalorder %s42, 1
        %s705 = scalar_select %p704, %s42, 1
        %s706 = smul.addr %s705, 8
        %s707 = scalar_lea.vmem %s2, %s706
        %p708 = pneg %p115
        %p709 = pneg %p112
        %p710 = pneg %p136
        %p711 = pneg %p133
        %p712 = pneg %p157
        %p713 = pneg %p154
        %p714 = pneg %p178
        %p715 = pneg %p175
        %p716 = pneg %p199
        %p717 = pneg %p196
        %p718 = pneg %p220
        %p719 = pneg %p217
        %p720 = pneg %p241
        %p721 = pneg %p238
        %p722 = pneg %p262
        %p723 = pneg %p259
        %p724 = pneg %p283
        %p725 = pneg %p280
        %p726 = pneg %p304
        %p727 = pneg %p301
        %p728 = pneg %p325
        %p729 = pneg %p322
        %p730 = pneg %p346
        %p731 = pneg %p343
        %p732 = pneg %p367
        %p733 = pneg %p364
        %p734 = pneg %p388
        %p735 = pneg %p385
        %p736 = pneg %p409
        %p737 = pneg %p406
        %p738 = pneg %p430
        %p739 = pneg %p427
        %p740 = pneg %p451
        %p741 = pneg %p448
        %p742 = pneg %p472
        %p743 = pneg %p469
        %p744 = pneg %p493
        %p745 = pneg %p490
        %p746 = pneg %p514
        %p747 = pneg %p511
        %p748 = pneg %p535
        %p749 = pneg %p532
        %p750 = pneg %p561
        %p751 = pneg %p558
        %s752 = sand.u32 %s548, 1
        %s753 = scalar_lea.sflag [#allocation3], %s752
        %s754 = sand.u32 %s548, 1
        %s755 = smul.addr %s754, 8
        %s756 = scalar_lea.vmem [#allocation2], %s755
        %p757 = pneg %p587
        %p758 = pneg %p584
        %s759 = sand.u32 %s574, 1
        %s760 = scalar_lea.sflag [#allocation5], %s759
        %s761 = sand.u32 %s574, 1
        %s762 = smul.addr %s761, 8
        %s763 = scalar_lea.vmem [#allocation4], %s762
        %p764 = scmp.lt.s32.totalorder %s42, 1
        %s765 = scalar_select %p764, %s42, 1
        %s766 = smul.addr %s765, 8
        %s767 = scalar_lea.vmem %s0, %s766
        %p768 = scmp.lt.s32.totalorder %s42, 1
        %s769 = scalar_select %p768, %s42, 1
        %s770 = scalar_lea.vmem %s1, %s769
        %p771 = scmp.lt.s32.totalorder %s42, 1
        %s772 = scalar_select %p771, %s42, 1
        %s773 = smul.addr %s772, 8
        %s774 = scalar_lea.vmem %s2, %s773
        %v775 = vld [vmem:[%s767] sm:$0xff]
        %v776 = vld [vmem:[%s770] sm:$0x1]
        %v777 = vld [vmem:[%s774] sm:$0xff]
        %v778 = vld [vmem:[%s3] sm:$0xff]
        %v779 = vld [vmem:[%s3 + $0x8] sm:$0xff]
        %v780 = vld [vmem:[%s3 + $0x10] sm:$0xff]
        %v781 = vld [vmem:[%s3 + $0x18] sm:$0xff]
        %v782 = vld [vmem:[%s4] sm:$0x1]
        %v784 = vperm.slane %v782, 0
        %vm786 = vcmask 261120
        %v788 = vsel %vm786, %v775, 0
        %790 = vmatpush.msra.mxu0 0.0
        %791 = vmatpush.msra.mxu0 0.0
        %792 = vmatpush.msra.mxu0 0.0
        %793 = vmatpush.msra.mxu0 0.0
        %794 = vmatpush.msra.mxu0 0.0
        %795 = vmatpush.msra.mxu0 0.0
        %796 = vmatpush.msra.mxu0 0.0
        %797 = vmatpush.msra.mxu0 0.0
        %798 = vmatpush.msra.mxu0 0.0
        %799 = vmatpush.msra.mxu0 0.0
        %800 = vmatpush.msra.mxu0 0.0
        %801 = vmatpush.msra.mxu0 0.0
        %802 = vmatpush.msra.mxu0 %v781
        %803 = vmatpush.msra.mxu0 %v780
        %804 = vmatpush.msra.mxu0 %v779
        %805 = vmatpush.msra.mxu0 %v778
        %806 = vmatmul.f32.gmra.mxu0 %v788
        %v807 = vpop.f32.mrf.mxu0
        %v808 = vadd.f32 %v784, %v807
        %809 = vdwg.mxu0
        %v810 = vld [vmem:[%s5] sm:$0xff]
        %v811 = vld [vmem:[%s5 + $0x8] sm:$0xff]
        %v812 = vld [vmem:[%s5 + $0x10] sm:$0xff]
        %v813 = vld [vmem:[%s5 + $0x18] sm:$0xff]
        %v814 = vld [vmem:[%s6] sm:$0x1]
        %v816 = vperm.slane %v814, 0
        %818 = vmatpush.msra.mxu0 0.0
        %819 = vmatpush.msra.mxu0 0.0
        %820 = vmatpush.msra.mxu0 0.0
        %821 = vmatpush.msra.mxu0 0.0
        %822 = vmatpush.msra.mxu0 0.0
        %823 = vmatpush.msra.mxu0 0.0
        %824 = vmatpush.msra.mxu0 0.0
        %825 = vmatpush.msra.mxu0 0.0
        %826 = vmatpush.msra.mxu0 0.0
        %827 = vmatpush.msra.mxu0 0.0
        %828 = vmatpush.msra.mxu0 0.0
        %829 = vmatpush.msra.mxu0 0.0
        %830 = vmatpush.msra.mxu0 %v813
        %831 = vmatpush.msra.mxu0 %v812
        %832 = vmatpush.msra.mxu0 %v811
        %833 = vmatpush.msra.mxu0 %v810
        %834 = vmatmul.f32.gmra.mxu0 %v788
        %v835 = vpop.f32.mrf.mxu0
        %v836 = vadd.f32 %v816, %v835
        %837 = vdwg.mxu0
        %839 = vrot.lane.b32.xlu0 %v808, 124
        %v840 = vpop.permute.xlu0 %839
        %841 = vrot.lane.b32.xlu0 %v808, 120
        %v842 = vpop.permute.xlu0 %841
        %843 = vrot.lane.b32.xlu0 %v808, 116
        %v844 = vpop.permute.xlu0 %843
        %845 = vrot.lane.b32.xlu0 %v808, 112
        %v846 = vpop.permute.xlu0 %845
        %847 = vrot.lane.b32.xlu0 %v808, 108
        %v848 = vpop.permute.xlu0 %847
        %849 = vrot.lane.b32.xlu0 %v808, 104
        %v850 = vpop.permute.xlu0 %849
        %851 = vrot.lane.b32.xlu0 %v808, 100
        %v852 = vpop.permute.xlu0 %851
        %854 = vrot.lane.b32.xlu0 %v836, 124
        %v855 = vpop.permute.xlu0 %854
        %856 = vrot.lane.b32.xlu0 %v836, 120
        %v857 = vpop.permute.xlu0 %856
        %858 = vrot.lane.b32.xlu0 %v836, 116
        %v859 = vpop.permute.xlu0 %858
        %860 = vrot.lane.b32.xlu0 %v836, 112
        %v861 = vpop.permute.xlu0 %860
        %862 = vrot.lane.b32.xlu0 %v836, 108
        %v863 = vpop.permute.xlu0 %862
        %864 = vrot.lane.b32.xlu0 %v836, 104
        %v865 = vpop.permute.xlu0 %864
        %866 = vrot.lane.b32.xlu0 %v836, 100
        %v867 = vpop.permute.xlu0 %866
        %vm868 = vcmask 31744
        %v869 = vsel %vm868, %v808, 0
        %v871 = vsel %vm868, %v836, 0
        %873 = vmatpush.xpose.msra.mxu0 0.0
        %874 = vmatpush.xpose.msra.mxu0 0.0
        %875 = vmatpush.xpose.msra.mxu0 0.0
        %876 = vmatpush.xpose.msra.mxu0 0.0
        %877 = vmatpush.xpose.msra.mxu0 0.0
        %878 = vmatpush.xpose.msra.mxu0 0.0
        %879 = vmatpush.xpose.msra.mxu0 0.0
        %880 = vmatpush.xpose.msra.mxu0 0.0
        %881 = vmatpush.xpose.msra.mxu0 0.0
        %882 = vmatpush.xpose.msra.mxu0 0.0
        %883 = vmatpush.xpose.msra.mxu0 0.0
        %884 = vmatpush.xpose.msra.mxu0 0.0
        %885 = vmatpush.xpose.msra.mxu0 0.0
        %886 = vmatpush.xpose.msra.mxu0 0.0
        %887 = vmatpush.xpose.msra.mxu0 0.0
        %888 = vmatpush.xpose.msra.mxu0 %v871
        %889 = vmatmul.f32.gmra.mxu0 %v869
        %v890 = vpop.f32.mrf.mxu0
        %v891 = vadd.f32 0.0, %v890
        %892 = vdwg.mxu0
        %v893 = vsel %vm868, %v840, 0
        %v895 = vsel %vm868, %v855, 0
        %897 = vmatpush.xpose.msra.mxu0 0.0
        %898 = vmatpush.xpose.msra.mxu0 0.0
        %899 = vmatpush.xpose.msra.mxu0 0.0
        %900 = vmatpush.xpose.msra.mxu0 0.0
        %901 = vmatpush.xpose.msra.mxu0 0.0
        %902 = vmatpush.xpose.msra.mxu0 0.0
        %903 = vmatpush.xpose.msra.mxu0 0.0
        %904 = vmatpush.xpose.msra.mxu0 0.0
        %905 = vmatpush.xpose.msra.mxu0 0.0
        %906 = vmatpush.xpose.msra.mxu0 0.0
        %907 = vmatpush.xpose.msra.mxu0 0.0
        %908 = vmatpush.xpose.msra.mxu0 0.0
        %909 = vmatpush.xpose.msra.mxu0 0.0
        %910 = vmatpush.xpose.msra.mxu0 0.0
        %911 = vmatpush.xpose.msra.mxu0 0.0
        %912 = vmatpush.xpose.msra.mxu0 %v895
        %913 = vmatmul.f32.gmra.mxu0 %v893
        %v914 = vpop.f32.mrf.mxu0
        %v915 = vadd.f32 0.0, %v914
        %916 = vdwg.mxu0
        %v917 = vsel %vm868, %v842, 0
        %v919 = vsel %vm868, %v857, 0
        %921 = vmatpush.xpose.msra.mxu0 0.0
        %922 = vmatpush.xpose.msra.mxu0 0.0
        %923 = vmatpush.xpose.msra.mxu0 0.0
        %924 = vmatpush.xpose.msra.mxu0 0.0
        %925 = vmatpush.xpose.msra.mxu0 0.0
        %926 = vmatpush.xpose.msra.mxu0 0.0
        %927 = vmatpush.xpose.msra.mxu0 0.0
        %928 = vmatpush.xpose.msra.mxu0 0.0
        %929 = vmatpush.xpose.msra.mxu0 0.0
        %930 = vmatpush.xpose.msra.mxu0 0.0
        %931 = vmatpush.xpose.msra.mxu0 0.0
        %932 = vmatpush.xpose.msra.mxu0 0.0
        %933 = vmatpush.xpose.msra.mxu0 0.0
        %934 = vmatpush.xpose.msra.mxu0 0.0
        %935 = vmatpush.xpose.msra.mxu0 0.0
        %936 = vmatpush.xpose.msra.mxu0 %v919
        %937 = vmatmul.f32.gmra.mxu0 %v917
        %v938 = vpop.f32.mrf.mxu0
        %v939 = vadd.f32 0.0, %v938
        %940 = vdwg.mxu0
        %v941 = vsel %vm868, %v844, 0
        %v943 = vsel %vm868, %v859, 0
        %945 = vmatpush.xpose.msra.mxu0 0.0
        %946 = vmatpush.xpose.msra.mxu0 0.0
        %947 = vmatpush.xpose.msra.mxu0 0.0
        %948 = vmatpush.xpose.msra.mxu0 0.0
        %949 = vmatpush.xpose.msra.mxu0 0.0
        %950 = vmatpush.xpose.msra.mxu0 0.0
        %951 = vmatpush.xpose.msra.mxu0 0.0
        %952 = vmatpush.xpose.msra.mxu0 0.0
        %953 = vmatpush.xpose.msra.mxu0 0.0
        %954 = vmatpush.xpose.msra.mxu0 0.0
        %955 = vmatpush.xpose.msra.mxu0 0.0
        %956 = vmatpush.xpose.msra.mxu0 0.0
        %957 = vmatpush.xpose.msra.mxu0 0.0
        %958 = vmatpush.xpose.msra.mxu0 0.0
        %959 = vmatpush.xpose.msra.mxu0 0.0
        %960 = vmatpush.xpose.msra.mxu0 %v943
        %961 = vmatmul.f32.gmra.mxu0 %v941
        %v962 = vpop.f32.mrf.mxu0
        %v963 = vadd.f32 0.0, %v962
        %964 = vdwg.mxu0
        %v965 = vsel %vm868, %v846, 0
        %v967 = vsel %vm868, %v861, 0
        %969 = vmatpush.xpose.msra.mxu0 0.0
        %970 = vmatpush.xpose.msra.mxu0 0.0
        %971 = vmatpush.xpose.msra.mxu0 0.0
        %972 = vmatpush.xpose.msra.mxu0 0.0
        %973 = vmatpush.xpose.msra.mxu0 0.0
        %974 = vmatpush.xpose.msra.mxu0 0.0
        %975 = vmatpush.xpose.msra.mxu0 0.0
        %976 = vmatpush.xpose.msra.mxu0 0.0
        %977 = vmatpush.xpose.msra.mxu0 0.0
        %978 = vmatpush.xpose.msra.mxu0 0.0
        %979 = vmatpush.xpose.msra.mxu0 0.0
        %980 = vmatpush.xpose.msra.mxu0 0.0
        %981 = vmatpush.xpose.msra.mxu0 0.0
        %982 = vmatpush.xpose.msra.mxu0 0.0
        %983 = vmatpush.xpose.msra.mxu0 0.0
        %984 = vmatpush.xpose.msra.mxu0 %v967
        %985 = vmatmul.f32.gmra.mxu0 %v965
        %v986 = vpop.f32.mrf.mxu0
        %v987 = vadd.f32 0.0, %v986
        %988 = vdwg.mxu0
        %v989 = vsel %vm868, %v848, 0
        %v991 = vsel %vm868, %v863, 0
        %993 = vmatpush.xpose.msra.mxu0 0.0
        %994 = vmatpush.xpose.msra.mxu0 0.0
        %995 = vmatpush.xpose.msra.mxu0 0.0
        %996 = vmatpush.xpose.msra.mxu0 0.0
        %997 = vmatpush.xpose.msra.mxu0 0.0
        %998 = vmatpush.xpose.msra.mxu0 0.0
        %999 = vmatpush.xpose.msra.mxu0 0.0
        %1000 = vmatpush.xpose.msra.mxu0 0.0
        %1001 = vmatpush.xpose.msra.mxu0 0.0
        %1002 = vmatpush.xpose.msra.mxu0 0.0
        %1003 = vmatpush.xpose.msra.mxu0 0.0
        %1004 = vmatpush.xpose.msra.mxu0 0.0
        %1005 = vmatpush.xpose.msra.mxu0 0.0
        %1006 = vmatpush.xpose.msra.mxu0 0.0
        %1007 = vmatpush.xpose.msra.mxu0 0.0
        %1008 = vmatpush.xpose.msra.mxu0 %v991
        %1009 = vmatmul.f32.gmra.mxu0 %v989
        %v1010 = vpop.f32.mrf.mxu0
        %v1011 = vadd.f32 0.0, %v1010
        %1012 = vdwg.mxu0
        %v1013 = vsel %vm868, %v850, 0
        %v1015 = vsel %vm868, %v865, 0
        %1017 = vmatpush.xpose.msra.mxu0 0.0
        %1018 = vmatpush.xpose.msra.mxu0 0.0
        %1019 = vmatpush.xpose.msra.mxu0 0.0
        %1020 = vmatpush.xpose.msra.mxu0 0.0
        %1021 = vmatpush.xpose.msra.mxu0 0.0
        %1022 = vmatpush.xpose.msra.mxu0 0.0
        %1023 = vmatpush.xpose.msra.mxu0 0.0
        %1024 = vmatpush.xpose.msra.mxu0 0.0
        %1025 = vmatpush.xpose.msra.mxu0 0.0
        %1026 = vmatpush.xpose.msra.mxu0 0.0
        %1027 = vmatpush.xpose.msra.mxu0 0.0
        %1028 = vmatpush.xpose.msra.mxu0 0.0
        %1029 = vmatpush.xpose.msra.mxu0 0.0
        %1030 = vmatpush.xpose.msra.mxu0 0.0
        %1031 = vmatpush.xpose.msra.mxu0 0.0
        %1032 = vmatpush.xpose.msra.mxu0 %v1015
        %1033 = vmatmul.f32.gmra.mxu0 %v1013
        %v1034 = vpop.f32.mrf.mxu0
        %v1035 = vadd.f32 0.0, %v1034
        %1036 = vdwg.mxu0
        %v1037 = vsel %vm868, %v852, 0
        %v1039 = vsel %vm868, %v867, 0
        %1041 = vmatpush.xpose.msra.mxu0 0.0
        %1042 = vmatpush.xpose.msra.mxu0 0.0
        %1043 = vmatpush.xpose.msra.mxu0 0.0
        %1044 = vmatpush.xpose.msra.mxu0 0.0
        %1045 = vmatpush.xpose.msra.mxu0 0.0
        %1046 = vmatpush.xpose.msra.mxu0 0.0
        %1047 = vmatpush.xpose.msra.mxu0 0.0
        %1048 = vmatpush.xpose.msra.mxu0 0.0
        %1049 = vmatpush.xpose.msra.mxu0 0.0
        %1050 = vmatpush.xpose.msra.mxu0 0.0
        %1051 = vmatpush.xpose.msra.mxu0 0.0
        %1052 = vmatpush.xpose.msra.mxu0 0.0
        %1053 = vmatpush.xpose.msra.mxu0 0.0
        %1054 = vmatpush.xpose.msra.mxu0 0.0
        %1055 = vmatpush.xpose.msra.mxu0 0.0
        %1056 = vmatpush.xpose.msra.mxu0 %v1039
        %1057 = vmatmul.f32.gmra.mxu0 %v1037
        %v1058 = vpop.f32.mrf.mxu0
        %v1059 = vadd.f32 0.0, %v1058
        %1060 = vdwg.mxu0
        %v1061 = vmul.f32 %v891, 0.5
        %v1062 = vmul.f32 %v915, 0.5
        %v1063 = vmul.f32 %v939, 0.5
        %v1064 = vmul.f32 %v963, 0.5
        %v1065 = vmul.f32 %v987, 0.5
        %v1066 = vmul.f32 %v1011, 0.5
        %v1067 = vmul.f32 %v1035, 0.5
        %v1068 = vmul.f32 %v1059, 0.5
        %vm1069 = vcmp.eq.f32.partialorder %v776, 0.0
        %v1070 = vsel %vm1069, 1, 0
        %v1071 = vperm.slane %v1070, 0
        %vm1072 = vcmp.eq.s32.totalorder %v1071, 1
        %v1073 = vsel %vm1072, -10000.0, %v1061
        %v1074 = vsel %vm1072, -10000.0, %v1062
        %v1075 = vsel %vm1072, -10000.0, %v1063
        %v1076 = vsel %vm1072, -10000.0, %v1064
        %v1077 = vsel %vm1072, -10000.0, %v1065
        %v1078 = vsel %vm1072, -10000.0, %v1066
        %v1079 = vsel %vm1072, -10000.0, %v1067
        %v1080 = vsel %vm1072, -10000.0, %v1068
        %vm1081 = vcmask 64512
        %v1082 = vsel %vm1081, %v1073, -inf
        %1083 = vmax.xlane.f32.xlu0 %v1082
        %v1084 = vpop.xlane.xlu0 %1083
        %v1085 = vsel %vm1081, %v1074, -inf
        %1086 = vmax.xlane.f32.xlu0 %v1085
        %v1087 = vpop.xlane.xlu0 %1086
        %v1088 = vsel %vm1081, %v1075, -inf
        %1089 = vmax.xlane.f32.xlu0 %v1088
        %v1090 = vpop.xlane.xlu0 %1089
        %v1091 = vsel %vm1081, %v1076, -inf
        %1092 = vmax.xlane.f32.xlu0 %v1091
        %v1093 = vpop.xlane.xlu0 %1092
        %v1094 = vsel %vm1081, %v1077, -inf
        %1095 = vmax.xlane.f32.xlu0 %v1094
        %v1096 = vpop.xlane.xlu0 %1095
        %v1097 = vsel %vm1081, %v1078, -inf
        %1098 = vmax.xlane.f32.xlu0 %v1097
        %v1099 = vpop.xlane.xlu0 %1098
        %v1100 = vsel %vm1081, %v1079, -inf
        %1101 = vmax.xlane.f32.xlu0 %v1100
        %v1102 = vpop.xlane.xlu0 %1101
        %v1103 = vsel %vm1081, %v1080, -inf
        %1104 = vmax.xlane.f32.xlu0 %v1103
        %v1105 = vpop.xlane.xlu0 %1104
        %v1106 = vsub.f32 %v1073, %v1084
        %v1107 = vsub.f32 %v1074, %v1087
        %v1108 = vsub.f32 %v1075, %v1090
        %v1109 = vsub.f32 %v1076, %v1093
        %v1110 = vsub.f32 %v1077, %v1096
        %v1111 = vsub.f32 %v1078, %v1099
        %v1112 = vsub.f32 %v1079, %v1102
        %v1113 = vsub.f32 %v1080, %v1105
        %v1114 = vmul.f32 %v1106, 1.442695
        %v1115 = vpow.pop %v1114
        %v1116 = vmul.f32 %v1107, 1.442695
        %v1117 = vpow.pop %v1116
        %v1118 = vmul.f32 %v1108, 1.442695
        %v1119 = vpow.pop %v1118
        %v1120 = vmul.f32 %v1109, 1.442695
        %v1121 = vpow.pop %v1120
        %v1122 = vmul.f32 %v1110, 1.442695
        %v1123 = vpow.pop %v1122
        %v1124 = vmul.f32 %v1111, 1.442695
        %v1125 = vpow.pop %v1124
        %v1126 = vmul.f32 %v1112, 1.442695
        %v1127 = vpow.pop %v1126
        %v1128 = vmul.f32 %v1113, 1.442695
        %v1129 = vpow.pop %v1128
        %v1130 = vsel %vm1081, %v1115, 0.0
        %1131 = vadd.xlane.f32.xlu0 %v1130
        %v1132 = vpop.xlane.xlu0 %1131
        %v1133 = vsel %vm1081, %v1117, 0.0
        %1134 = vadd.xlane.f32.xlu0 %v1133
        %v1135 = vpop.xlane.xlu0 %1134
        %v1136 = vsel %vm1081, %v1119, 0.0
        %1137 = vadd.xlane.f32.xlu0 %v1136
        %v1138 = vpop.xlane.xlu0 %1137
        %v1139 = vsel %vm1081, %v1121, 0.0
        %1140 = vadd.xlane.f32.xlu0 %v1139
        %v1141 = vpop.xlane.xlu0 %1140
        %v1142 = vsel %vm1081, %v1123, 0.0
        %1143 = vadd.xlane.f32.xlu0 %v1142
        %v1144 = vpop.xlane.xlu0 %1143
        %v1145 = vsel %vm1081, %v1125, 0.0
        %1146 = vadd.xlane.f32.xlu0 %v1145
        %v1147 = vpop.xlane.xlu0 %1146
        %v1148 = vsel %vm1081, %v1127, 0.0
        %1149 = vadd.xlane.f32.xlu0 %v1148
        %v1150 = vpop.xlane.xlu0 %1149
        %v1151 = vsel %vm1081, %v1129, 0.0
        %1152 = vadd.xlane.f32.xlu0 %v1151
        %v1153 = vpop.xlane.xlu0 %1152
        %v1154 = vrcp.pop %v1132
        %v1155 = vmul.f32 %v1132, %v1154
        %v1156 = vsub.f32 1.0, %v1155
        %v1157 = vmul.f32 %v1154, %v1156
        %v1158 = vadd.f32 %v1154, %v1157
        %vm1159 = vweird.f32 %v1132
        %vm1160 = vweird.f32 %v1154
        %vm1161 = vmor %vm1159, %vm1160
        %v1162 = vsel %vm1161, %v1154, %v1158
        %v1163 = vand.u32 2147483647, %v1132
        %vm1164 = vcmp.eq.f32.partialorder %v1163, 8.507059e+37
        %v1165 = vand.u32 %v1132, 2147483648
        %v1166 = vor.u32 1.1754944e-38, %v1165
        %v1167 = vsel %vm1164, %v1166, %v1162
        %v1168 = vmul.f32 %v1115, %v1167
        %v1169 = vrcp.pop %v1135
        %v1170 = vmul.f32 %v1135, %v1169
        %v1171 = vsub.f32 1.0, %v1170
        %v1172 = vmul.f32 %v1169, %v1171
        %v1173 = vadd.f32 %v1169, %v1172
        %vm1174 = vweird.f32 %v1135
        %vm1175 = vweird.f32 %v1169
        %vm1176 = vmor %vm1174, %vm1175
        %v1177 = vsel %vm1176, %v1169, %v1173
        %v1178 = vand.u32 2147483647, %v1135
        %vm1179 = vcmp.eq.f32.partialorder %v1178, 8.507059e+37
        %v1180 = vand.u32 %v1135, 2147483648
        %v1181 = vor.u32 1.1754944e-38, %v1180
        %v1182 = vsel %vm1179, %v1181, %v1177
        %v1183 = vmul.f32 %v1117, %v1182
        %v1184 = vrcp.pop %v1138
        %v1185 = vmul.f32 %v1138, %v1184
        %v1186 = vsub.f32 1.0, %v1185
        %v1187 = vmul.f32 %v1184, %v1186
        %v1188 = vadd.f32 %v1184, %v1187
        %vm1189 = vweird.f32 %v1138
        %vm1190 = vweird.f32 %v1184
        %vm1191 = vmor %vm1189, %vm1190
        %v1192 = vsel %vm1191, %v1184, %v1188
        %v1193 = vand.u32 2147483647, %v1138
        %vm1194 = vcmp.eq.f32.partialorder %v1193, 8.507059e+37
        %v1195 = vand.u32 %v1138, 2147483648
        %v1196 = vor.u32 1.1754944e-38, %v1195
        %v1197 = vsel %vm1194, %v1196, %v1192
        %v1198 = vmul.f32 %v1119, %v1197
        %v1199 = vrcp.pop %v1141
        %v1200 = vmul.f32 %v1141, %v1199
        %v1201 = vsub.f32 1.0, %v1200
        %v1202 = vmul.f32 %v1199, %v1201
        %v1203 = vadd.f32 %v1199, %v1202
        %vm1204 = vweird.f32 %v1141
        %vm1205 = vweird.f32 %v1199
        %vm1206 = vmor %vm1204, %vm1205
        %v1207 = vsel %vm1206, %v1199, %v1203
        %v1208 = vand.u32 2147483647, %v1141
        %vm1209 = vcmp.eq.f32.partialorder %v1208, 8.507059e+37
        %v1210 = vand.u32 %v1141, 2147483648
        %v1211 = vor.u32 1.1754944e-38, %v1210
        %v1212 = vsel %vm1209, %v1211, %v1207
        %v1213 = vmul.f32 %v1121, %v1212
        %v1214 = vrcp.pop %v1144
        %v1215 = vmul.f32 %v1144, %v1214
        %v1216 = vsub.f32 1.0, %v1215
        %v1217 = vmul.f32 %v1214, %v1216
        %v1218 = vadd.f32 %v1214, %v1217
        %vm1219 = vweird.f32 %v1144
        %vm1220 = vweird.f32 %v1214
        %vm1221 = vmor %vm1219, %vm1220
        %v1222 = vsel %vm1221, %v1214, %v1218
        %v1223 = vand.u32 2147483647, %v1144
        %vm1224 = vcmp.eq.f32.partialorder %v1223, 8.507059e+37
        %v1225 = vand.u32 %v1144, 2147483648
        %v1226 = vor.u32 1.1754944e-38, %v1225
        %v1227 = vsel %vm1224, %v1226, %v1222
        %v1228 = vmul.f32 %v1123, %v1227
        %v1229 = vrcp.pop %v1147
        %v1230 = vmul.f32 %v1147, %v1229
        %v1231 = vsub.f32 1.0, %v1230
        %v1232 = vmul.f32 %v1229, %v1231
        %v1233 = vadd.f32 %v1229, %v1232
        %vm1234 = vweird.f32 %v1147
        %vm1235 = vweird.f32 %v1229
        %vm1236 = vmor %vm1234, %vm1235
        %v1237 = vsel %vm1236, %v1229, %v1233
        %v1238 = vand.u32 2147483647, %v1147
        %vm1239 = vcmp.eq.f32.partialorder %v1238, 8.507059e+37
        %v1240 = vand.u32 %v1147, 2147483648
        %v1241 = vor.u32 1.1754944e-38, %v1240
        %v1242 = vsel %vm1239, %v1241, %v1237
        %v1243 = vmul.f32 %v1125, %v1242
        %v1244 = vrcp.pop %v1150
        %v1245 = vmul.f32 %v1150, %v1244
        %v1246 = vsub.f32 1.0, %v1245
        %v1247 = vmul.f32 %v1244, %v1246
        %v1248 = vadd.f32 %v1244, %v1247
        %vm1249 = vweird.f32 %v1150
        %vm1250 = vweird.f32 %v1244
        %vm1251 = vmor %vm1249, %vm1250
        %v1252 = vsel %vm1251, %v1244, %v1248
        %v1253 = vand.u32 2147483647, %v1150
        %vm1254 = vcmp.eq.f32.partialorder %v1253, 8.507059e+37
        %v1255 = vand.u32 %v1150, 2147483648
        %v1256 = vor.u32 1.1754944e-38, %v1255
        %v1257 = vsel %vm1254, %v1256, %v1252
        %v1258 = vmul.f32 %v1127, %v1257
        %v1259 = vrcp.pop %v1153
        %v1260 = vmul.f32 %v1153, %v1259
        %v1261 = vsub.f32 1.0, %v1260
        %v1262 = vmul.f32 %v1259, %v1261
        %v1263 = vadd.f32 %v1259, %v1262
        %vm1264 = vweird.f32 %v1153
        %vm1265 = vweird.f32 %v1259
        %vm1266 = vmor %vm1264, %vm1265
        %v1267 = vsel %vm1266, %v1259, %v1263
        %v1268 = vand.u32 2147483647, %v1153
        %vm1269 = vcmp.eq.f32.partialorder %v1268, 8.507059e+37
        %v1270 = vand.u32 %v1153, 2147483648
        %v1271 = vor.u32 1.1754944e-38, %v1270
        %v1272 = vsel %vm1269, %v1271, %v1267
        %v1273 = vmul.f32 %v1129, %v1272
        %v1274 = vsel %vm1081, %v1168, 0.0
        %v1275 = vsel %vm1081, %v1183, 0.0
        %v1276 = vadd.f32 %v1274, %v1275
        %v1277 = vsel %vm1081, %v1198, 0.0
        %v1278 = vadd.f32 %v1276, %v1277
        %v1279 = vsel %vm1081, %v1213, 0.0
        %v1280 = vadd.f32 %v1278, %v1279
        %v1281 = vsel %vm1081, %v1228, 0.0
        %v1282 = vadd.f32 %v1280, %v1281
        %v1283 = vsel %vm1081, %v1243, 0.0
        %v1284 = vadd.f32 %v1282, %v1283
        %v1285 = vsel %vm1081, %v1258, 0.0
        %v1286 = vadd.f32 %v1284, %v1285
        %v1287 = vsel %vm1081, %v1273, 0.0
        %v1288 = vadd.f32 %v1286, %v1287
        %v1289 = vrcp.pop 8.0
        %v1290 = vmul.f32 8.0, %v1289
        %v1291 = vsub.f32 1.0, %v1290
        %v1292 = vmul.f32 %v1289, %v1291
        %v1293 = vadd.f32 %v1289, %v1292
        %vm1294 = vweird.f32 %v1289
        %v1295 = vsel %vm1294, %v1289, %v1293
        %v1296 = vmul.f32 %v1288, %v1295
        %v1297 = vlaneseq
        %v1298 = vshrl.u32 %v1297, 7
        %v1299 = vlaneseq
        %v1300 = vand.u32 %v1299, 127
        %vm1301 = vcmp.eq.s32.totalorder %v1298, %v1300
        %v1302 = vsel %vm1301, 1.0, %v1296
        %1303 = vxpose.xlu0.b32.start [1/16] %v776, 128
        %1304 = vxpose.xlu0.b32.cont [2/16] 0.0, 128
        %1305 = vxpose.xlu0.b32.cont [3/16] 0.0, 128
        %1306 = vxpose.xlu0.b32.cont [4/16] 0.0, 128
        %1307 = vxpose.xlu0.b32.cont [5/16] 0.0, 128
        %1308 = vxpose.xlu0.b32.cont [6/16] 0.0, 128
        %1309 = vxpose.xlu0.b32.cont [7/16] 0.0, 128
        %1310 = vxpose.xlu0.b32.cont [8/16] 0.0, 128
        %1311 = vxpose.xlu0.b32.cont [9/16] 0.0, 128
        %1312 = vxpose.xlu0.b32.cont [10/16] 0.0, 128
        %1313 = vxpose.xlu0.b32.cont [11/16] 0.0, 128
        %1314 = vxpose.xlu0.b32.cont [12/16] 0.0, 128
        %1315 = vxpose.xlu0.b32.cont [13/16] 0.0, 128
        %1316 = vxpose.xlu0.b32.cont [14/16] 0.0, 128
        %1317 = vxpose.xlu0.b32.cont [15/16] 0.0, 128
        %1318 = vxpose.xlu0.b32.end [16/16] 0.0, 128
        %v1319 = vpop.trf.xlu0
        %v1320 = vpop.trf.xlu0
        %v1321 = vpop.trf.xlu0
        %v1322 = vpop.trf.xlu0
        %v1323 = vpop.trf.xlu0
        %v1324 = vpop.trf.xlu0
        %v1325 = vpop.trf.xlu0
        %v1326 = vpop.trf.xlu0
        %v1327 = vpop.trf.xlu0
        %v1328 = vpop.trf.xlu0
        %v1329 = vpop.trf.xlu0
        %v1330 = vpop.trf.xlu0
        %v1331 = vpop.trf.xlu0
        %v1332 = vpop.trf.xlu0
        %v1333 = vpop.trf.xlu0
        %v1334 = vpop.trf.xlu0
        %1336 = vset.pattern.permute.xlu0 0
        %1337 = vperm.xlu0 %1336, %v1319
        %v1338 = vpop.permute.xlu0 %1337
        %v1340 = vmul.f32 %v1302, %v1338
        %v1341 = vld [vmem:[%s7] sm:$0xff]
        %v1342 = vld [vmem:[%s7 + $0x8] sm:$0xff]
        %v1343 = vld [vmem:[%s7 + $0x10] sm:$0xff]
        %v1344 = vld [vmem:[%s7 + $0x18] sm:$0xff]
        %v1345 = vld [vmem:[%s8] sm:$0x1]
        %v1346 = vld [vmem:[%s9] sm:$0xff]
        %v1347 = vld [vmem:[%s9 + $0x8] sm:$0xff]
        %v1348 = vld [vmem:[%s9 + $0x10] sm:$0xff]
        %v1349 = vld [vmem:[%s9 + $0x18] sm:$0xff]
        %v1350 = vld [vmem:[%s10] sm:$0x1]
        %1351 = vmatpush.msra.mxu0 0.0
        %1352 = vmatpush.msra.mxu0 0.0
        %1353 = vmatpush.msra.mxu0 0.0
        %1354 = vmatpush.msra.mxu0 0.0
        %1355 = vmatpush.msra.mxu0 0.0
        %1356 = vmatpush.msra.mxu0 0.0
        %1357 = vmatpush.msra.mxu0 0.0
        %1358 = vmatpush.msra.mxu0 0.0
        %1359 = vmatpush.msra.mxu0 0.0
        %1360 = vmatpush.msra.mxu0 0.0
        %1361 = vmatpush.msra.mxu0 0.0
        %1362 = vmatpush.msra.mxu0 0.0
        %1363 = vmatpush.msra.mxu0 %v1344
        %1364 = vmatpush.msra.mxu0 %v1343
        %1365 = vmatpush.msra.mxu0 %v1342
        %1366 = vmatpush.msra.mxu0 %v1341
        %1367 = vmatmul.f32.gmra.mxu0 %v788
        %v1368 = vpop.f32.mrf.mxu0
        %v1369 = vadd.f32 0.0, %v1368
        %1370 = vdwg.mxu0
        %1371 = vmatpush.msra.mxu0 0.0
        %1372 = vmatpush.msra.mxu0 0.0
        %1373 = vmatpush.msra.mxu0 0.0
        %1374 = vmatpush.msra.mxu0 0.0
        %1375 = vmatpush.msra.mxu0 0.0
        %1376 = vmatpush.msra.mxu0 0.0
        %1377 = vmatpush.msra.mxu0 0.0
        %1378 = vmatpush.msra.mxu0 0.0
        %1379 = vmatpush.msra.mxu0 0.0
        %1380 = vmatpush.msra.mxu0 0.0
        %1381 = vmatpush.msra.mxu0 0.0
        %1382 = vmatpush.msra.mxu0 0.0
        %1383 = vmatpush.msra.mxu0 %v1349
        %1384 = vmatpush.msra.mxu0 %v1348
        %1385 = vmatpush.msra.mxu0 %v1347
        %1386 = vmatpush.msra.mxu0 %v1346
        %1387 = vmatmul.f32.gmra.mxu0 %v788
        %v1388 = vpop.f32.mrf.mxu0
        %v1389 = vadd.f32 0.0, %v1388
        %1390 = vdwg.mxu0
        %v1392 = vperm.slane %v1345, 0
        %v1395 = vsel %vm1081, %v1340, 0
        %1397 = vmatpush.msra.mxu0 0.0
        %1398 = vmatpush.msra.mxu0 0.0
        %1399 = vmatpush.msra.mxu0 0.0
        %1400 = vmatpush.msra.mxu0 0.0
        %1401 = vmatpush.msra.mxu0 0.0
        %1402 = vmatpush.msra.mxu0 0.0
        %1403 = vmatpush.msra.mxu0 0.0
        %1404 = vmatpush.msra.mxu0 0.0
        %1405 = vmatpush.msra.mxu0 0.0
        %1406 = vmatpush.msra.mxu0 0.0
        %1407 = vmatpush.msra.mxu0 0.0
        %1408 = vmatpush.msra.mxu0 0.0
        %1409 = vmatpush.msra.mxu0 0.0
        %1410 = vmatpush.msra.mxu0 0.0
        %1411 = vmatpush.msra.mxu0 0.0
        %1412 = vmatpush.msra.mxu0 %v1369
        %1413 = vmatmul.f32.gmra.mxu0 %v1395
        %v1414 = vpop.f32.mrf.mxu0
        %v1415 = vadd.f32 %v1392, %v1414
        %1416 = vdwg.mxu0
        %v1418 = vperm.slane %v1350, 0
        %v1421 = vsel %vm1081, %v777, 0
        %1423 = vmatpush.msra.mxu0 0.0
        %1424 = vmatpush.msra.mxu0 0.0
        %1425 = vmatpush.msra.mxu0 0.0
        %1426 = vmatpush.msra.mxu0 0.0
        %1427 = vmatpush.msra.mxu0 0.0
        %1428 = vmatpush.msra.mxu0 0.0
        %1429 = vmatpush.msra.mxu0 0.0
        %1430 = vmatpush.msra.mxu0 0.0
        %1431 = vmatpush.msra.mxu0 0.0
        %1432 = vmatpush.msra.mxu0 0.0
        %1433 = vmatpush.msra.mxu0 0.0
        %1434 = vmatpush.msra.mxu0 0.0
        %1435 = vmatpush.msra.mxu0 0.0
        %1436 = vmatpush.msra.mxu0 0.0
        %1437 = vmatpush.msra.mxu0 0.0
        %1438 = vmatpush.msra.mxu0 %v1389
        %1439 = vmatmul.f32.gmra.mxu0 %v1421
        %v1440 = vpop.f32.mrf.mxu0
        %v1441 = vadd.f32 %v1418, %v1440
        %1442 = vdwg.mxu0
        %v1443 = vxor.u32 %v1441, 2147483648
        %v1444 = vmul.f32 %v1443, 1.442695
        %v1445 = vpow.pop %v1444
        %v1446 = vadd.f32 %v1445, 1.0
        %v1447 = vrcp.pop %v1446
        %v1448 = vmul.f32 %v1446, %v1447
        %v1449 = vsub.f32 1.0, %v1448
        %v1450 = vmul.f32 %v1447, %v1449
        %v1451 = vadd.f32 %v1447, %v1450
        %vm1452 = vweird.f32 %v1446
        %vm1453 = vweird.f32 %v1447
        %vm1454 = vmor %vm1452, %vm1453
        %v1455 = vsel %vm1454, %v1447, %v1451
        %v1456 = vand.u32 2147483647, %v1446
        %vm1457 = vcmp.eq.f32.partialorder %v1456, 8.507059e+37
        %v1458 = vand.u32 %v1446, 2147483648
        %v1459 = vor.u32 1.1754944e-38, %v1458
        %v1460 = vsel %vm1457, %v1459, %v1455
        %v1461 = vmul.f32 1.0, %v1460
        %v1462 = vmul.f32 %v1461, 0.2
        %v1463 = vsub.f32 1.0, %v1462
        %v1464 = vmul.f32 %v1463, %v1415
        %v1465 = vmul.f32 %v1462, %v1441
        %v1466 = vadd.f32 %v1464, %v1465
        %v1467 = vld [vmem:[%s15] sm:$0xff]
        %v1468 = vld [vmem:[%s15 + $0x8] sm:$0xff]
        %v1469 = vld [vmem:[%s16] sm:$0x1]
        %v1471 = vperm.slane %v1469, 0
        %vm1473 = vcmask 130048
        %v1475 = vsel %vm1473, %v1466, 0
        %1477 = vmatpush.msra.mxu0 0.0
        %1478 = vmatpush.msra.mxu0 0.0
        %1479 = vmatpush.msra.mxu0 0.0
        %1480 = vmatpush.msra.mxu0 0.0
        %1481 = vmatpush.msra.mxu0 0.0
        %1482 = vmatpush.msra.mxu0 0.0
        %1483 = vmatpush.msra.mxu0 0.0
        %1484 = vmatpush.msra.mxu0 0.0
        %1485 = vmatpush.msra.mxu0 0.0
        %1486 = vmatpush.msra.mxu0 0.0
        %1487 = vmatpush.msra.mxu0 0.0
        %1488 = vmatpush.msra.mxu0 0.0
        %1489 = vmatpush.msra.mxu0 0.0
        %1490 = vmatpush.msra.mxu0 0.0
        %1491 = vmatpush.msra.mxu0 %v1468
        %1492 = vmatpush.msra.mxu0 %v1467
        %1493 = vmatmul.f32.gmra.mxu0 %v1475
        %v1494 = vpop.f32.mrf.mxu0
        %v1495 = vadd.f32 %v1471, %v1494
        %1496 = vdwg.mxu0
        %v1497 = vmax.f32 %v1495, 0.0
        %v1498 = vld [vmem:[%s17] sm:$0xff]
        %v1499 = vld [vmem:[%s17 + $0x8] sm:$0xff]
        %v1500 = vld [vmem:[%s17 + $0x10] sm:$0xff]
        %v1501 = vld [vmem:[%s17 + $0x18] sm:$0xff]
        %v1502 = vld [vmem:[%s18] sm:$0x1]
        %v1504 = vperm.slane %v1502, 0
        %1506 = vmatpush.msra.mxu0 0.0
        %1507 = vmatpush.msra.mxu0 0.0
        %1508 = vmatpush.msra.mxu0 0.0
        %1509 = vmatpush.msra.mxu0 0.0
        %1510 = vmatpush.msra.mxu0 0.0
        %1511 = vmatpush.msra.mxu0 0.0
        %1512 = vmatpush.msra.mxu0 0.0
        %1513 = vmatpush.msra.mxu0 0.0
        %1514 = vmatpush.msra.mxu0 0.0
        %1515 = vmatpush.msra.mxu0 0.0
        %1516 = vmatpush.msra.mxu0 0.0
        %1517 = vmatpush.msra.mxu0 0.0
        %1518 = vmatpush.msra.mxu0 %v1501
        %1519 = vmatpush.msra.mxu0 %v1500
        %1520 = vmatpush.msra.mxu0 %v1499
        %1521 = vmatpush.msra.mxu0 %v1498
        %1522 = vmatmul.f32.gmra.mxu0 %v788
        %v1523 = vpop.f32.mrf.mxu0
        %v1524 = vadd.f32 %v1504, %v1523
        %1525 = vdwg.mxu0
        %v1526 = vxor.u32 %v1524, 2147483648
        %v1527 = vmul.f32 %v1526, 1.442695
        %v1528 = vpow.pop %v1527
        %v1529 = vadd.f32 %v1528, 1.0
        %v1530 = vrcp.pop %v1529
        %v1531 = vmul.f32 %v1529, %v1530
        %v1532 = vsub.f32 1.0, %v1531
        %v1533 = vmul.f32 %v1530, %v1532
        %v1534 = vadd.f32 %v1530, %v1533
        %vm1535 = vweird.f32 %v1529
        %vm1536 = vweird.f32 %v1530
        %vm1537 = vmor %vm1535, %vm1536
        %v1538 = vsel %vm1537, %v1530, %v1534
        %v1539 = vand.u32 2147483647, %v1529
        %vm1540 = vcmp.eq.f32.partialorder %v1539, 8.507059e+37
        %v1541 = vand.u32 %v1529, 2147483648
        %v1542 = vor.u32 1.1754944e-38, %v1541
        %v1543 = vsel %vm1540, %v1542, %v1538
        %v1544 = vmul.f32 1.0, %v1543
        %v1545 = vmul.f32 %v1544, %v1497
        %v1546 = vsub.f32 1.0, %v1544
        %v1547 = vmul.f32 %v1546, %v1524
        %v1548 = vadd.f32 %v1545, %v1547
        %v1549 = vld [vmem:[%s11] sm:$0xff]
        %v1550 = vld [vmem:[%s11 + $0x8] sm:$0xff]
        %v1551 = vld [vmem:[%s12] sm:$0x1]
        %v1552 = vld [vmem:[%s13] sm:$0xff]
        %v1553 = vld [vmem:[%s13 + $0x8] sm:$0xff]
        %v1554 = vld [vmem:[%s14] sm:$0x1]
        %v1556 = vsel %vm1473, %v1548, 0
        %1558 = vmatpush.msra.mxu0 0.0
        %1559 = vmatpush.msra.mxu0 0.0
        %1560 = vmatpush.msra.mxu0 0.0
        %1561 = vmatpush.msra.mxu0 0.0
        %1562 = vmatpush.msra.mxu0 0.0
        %1563 = vmatpush.msra.mxu0 0.0
        %1564 = vmatpush.msra.mxu0 0.0
        %1565 = vmatpush.msra.mxu0 0.0
        %1566 = vmatpush.msra.mxu0 0.0
        %1567 = vmatpush.msra.mxu0 0.0
        %1568 = vmatpush.msra.mxu0 0.0
        %1569 = vmatpush.msra.mxu0 0.0
        %1570 = vmatpush.msra.mxu0 0.0
        %1571 = vmatpush.msra.mxu0 0.0
        %1572 = vmatpush.msra.mxu0 %v1550
        %1573 = vmatpush.msra.mxu0 %v1549
        %1574 = vmatmul.f32.gmra.mxu0 %v1556
        %v1575 = vpop.f32.mrf.mxu0
        %v1576 = vadd.f32 0.0, %v1575
        %1577 = vdwg.mxu0
        %1578 = vmatpush.msra.mxu0 0.0
        %1579 = vmatpush.msra.mxu0 0.0
        %1580 = vmatpush.msra.mxu0 0.0
        %1581 = vmatpush.msra.mxu0 0.0
        %1582 = vmatpush.msra.mxu0 0.0
        %1583 = vmatpush.msra.mxu0 0.0
        %1584 = vmatpush.msra.mxu0 0.0
        %1585 = vmatpush.msra.mxu0 0.0
        %1586 = vmatpush.msra.mxu0 0.0
        %1587 = vmatpush.msra.mxu0 0.0
        %1588 = vmatpush.msra.mxu0 0.0
        %1589 = vmatpush.msra.mxu0 0.0
        %1590 = vmatpush.msra.mxu0 0.0
        %1591 = vmatpush.msra.mxu0 0.0
        %1592 = vmatpush.msra.mxu0 %v1553
        %1593 = vmatpush.msra.mxu0 %v1552
        %1594 = vmatmul.f32.gmra.mxu0 %v1556
        %v1595 = vpop.f32.mrf.mxu0
        %v1596 = vadd.f32 0.0, %v1595
        %1597 = vdwg.mxu0
        %v1598 = vperm.slane %v1551, 0
        %1599 = vmatpush.msra.mxu0 0.0
        %1600 = vmatpush.msra.mxu0 0.0
        %1601 = vmatpush.msra.mxu0 0.0
        %1602 = vmatpush.msra.mxu0 0.0
        %1603 = vmatpush.msra.mxu0 0.0
        %1604 = vmatpush.msra.mxu0 0.0
        %1605 = vmatpush.msra.mxu0 0.0
        %1606 = vmatpush.msra.mxu0 0.0
        %1607 = vmatpush.msra.mxu0 0.0
        %1608 = vmatpush.msra.mxu0 0.0
        %1609 = vmatpush.msra.mxu0 0.0
        %1610 = vmatpush.msra.mxu0 0.0
        %1611 = vmatpush.msra.mxu0 0.0
        %1612 = vmatpush.msra.mxu0 0.0
        %1613 = vmatpush.msra.mxu0 0.0
        %1614 = vmatpush.msra.mxu0 %v1576
        %1615 = vmatmul.f32.gmra.mxu0 %v1395
        %v1616 = vpop.f32.mrf.mxu0
        %v1617 = vadd.f32 %v1598, %v1616
        %1618 = vdwg.mxu0
        %v1619 = vperm.slane %v1554, 0
        %1620 = vmatpush.msra.mxu0 0.0
        %1621 = vmatpush.msra.mxu0 0.0
        %1622 = vmatpush.msra.mxu0 0.0
        %1623 = vmatpush.msra.mxu0 0.0
        %1624 = vmatpush.msra.mxu0 0.0
        %1625 = vmatpush.msra.mxu0 0.0
        %1626 = vmatpush.msra.mxu0 0.0
        %1627 = vmatpush.msra.mxu0 0.0
        %1628 = vmatpush.msra.mxu0 0.0
        %1629 = vmatpush.msra.mxu0 0.0
        %1630 = vmatpush.msra.mxu0 0.0
        %1631 = vmatpush.msra.mxu0 0.0
        %1632 = vmatpush.msra.mxu0 0.0
        %1633 = vmatpush.msra.mxu0 0.0
        %1634 = vmatpush.msra.mxu0 0.0
        %1635 = vmatpush.msra.mxu0 %v1596
        %1636 = vmatmul.f32.gmra.mxu0 %v1421
        %v1637 = vpop.f32.mrf.mxu0
        %v1638 = vadd.f32 %v1619, %v1637
        %1639 = vdwg.mxu0
        %v1640 = vxor.u32 %v1638, 2147483648
        %v1641 = vmul.f32 %v1640, 1.442695
        %v1642 = vpow.pop %v1641
        %v1643 = vadd.f32 %v1642, 1.0
        %v1644 = vrcp.pop %v1643
        %v1645 = vmul.f32 %v1643, %v1644
        %v1646 = vsub.f32 1.0, %v1645
        %v1647 = vmul.f32 %v1644, %v1646
        %v1648 = vadd.f32 %v1644, %v1647
        %vm1649 = vweird.f32 %v1643
        %vm1650 = vweird.f32 %v1644
        %vm1651 = vmor %vm1649, %vm1650
        %v1652 = vsel %vm1651, %v1644, %v1648
        %v1653 = vand.u32 2147483647, %v1643
        %vm1654 = vcmp.eq.f32.partialorder %v1653, 8.507059e+37
        %v1655 = vand.u32 %v1643, 2147483648
        %v1656 = vor.u32 1.1754944e-38, %v1655
        %v1657 = vsel %vm1654, %v1656, %v1652
        %v1658 = vmul.f32 1.0, %v1657
        %v1659 = vmul.f32 %v1658, 0.2
        %v1660 = vsub.f32 1.0, %v1659
        %v1661 = vmul.f32 %v1660, %v1617
        %v1662 = vmul.f32 %v1659, %v1638
        %v1663 = vadd.f32 %v1661, %v1662
        %v1665 = vsel %vm1473, %v1663, 0
        %1667 = vmatpush.msra.mxu0 0.0
        %1668 = vmatpush.msra.mxu0 0.0
        %1669 = vmatpush.msra.mxu0 0.0
        %1670 = vmatpush.msra.mxu0 0.0
        %1671 = vmatpush.msra.mxu0 0.0
        %1672 = vmatpush.msra.mxu0 0.0
        %1673 = vmatpush.msra.mxu0 0.0
        %1674 = vmatpush.msra.mxu0 0.0
        %1675 = vmatpush.msra.mxu0 0.0
        %1676 = vmatpush.msra.mxu0 0.0
        %1677 = vmatpush.msra.mxu0 0.0
        %1678 = vmatpush.msra.mxu0 0.0
        %1679 = vmatpush.msra.mxu0 0.0
        %1680 = vmatpush.msra.mxu0 0.0
        %1681 = vmatpush.msra.mxu0 %v1468
        %1682 = vmatpush.msra.mxu0 %v1467
        %1683 = vmatmul.f32.gmra.mxu0 %v1665
        %v1684 = vpop.f32.mrf.mxu0
        %v1685 = vadd.f32 %v1471, %v1684
        %1686 = vdwg.mxu0
        %v1687 = vmax.f32 %v1685, 0.0
        %v1688 = vxor.u32 %v1548, 2147483648
        %v1689 = vmul.f32 %v1688, 1.442695
        %v1690 = vpow.pop %v1689
        %v1691 = vadd.f32 %v1690, 1.0
        %v1692 = vrcp.pop %v1691
        %v1693 = vmul.f32 %v1691, %v1692
        %v1694 = vsub.f32 1.0, %v1693
        %v1695 = vmul.f32 %v1692, %v1694
        %v1696 = vadd.f32 %v1692, %v1695
        %vm1697 = vweird.f32 %v1691
        %vm1698 = vweird.f32 %v1692
        %vm1699 = vmor %vm1697, %vm1698
        %v1700 = vsel %vm1699, %v1692, %v1696
        %v1701 = vand.u32 2147483647, %v1691
        %vm1702 = vcmp.eq.f32.partialorder %v1701, 8.507059e+37
        %v1703 = vand.u32 %v1691, 2147483648
        %v1704 = vor.u32 1.1754944e-38, %v1703
        %v1705 = vsel %vm1702, %v1704, %v1700
        %v1706 = vmul.f32 1.0, %v1705
        %v1707 = vmul.f32 %v1706, %v1687
        %v1708 = vsub.f32 1.0, %v1706
        %v1709 = vmul.f32 %v1708, %v1548
        %v1710 = vadd.f32 %v1707, %v1709
        %s1711 = scalar_lea.vmem %s11, 16
        %v1712 = vld [vmem:[%s1711] sm:$0xff]
        %v1713 = vld [vmem:[%s1711 + $0x8] sm:$0xff]
        %v1714 = vld [vmem:[%s12 + $0x1] sm:$0x1]
        %s1715 = scalar_lea.vmem %s13, 16
        %v1716 = vld [vmem:[%s1715] sm:$0xff]
        %v1717 = vld [vmem:[%s1715 + $0x8] sm:$0xff]
        %v1718 = vld [vmem:[%s14 + $0x1] sm:$0x1]
        %v1720 = vsel %vm1473, %v1710, 0
        %1722 = vmatpush.msra.mxu0 0.0
        %1723 = vmatpush.msra.mxu0 0.0
        %1724 = vmatpush.msra.mxu0 0.0
        %1725 = vmatpush.msra.mxu0 0.0
        %1726 = vmatpush.msra.mxu0 0.0
        %1727 = vmatpush.msra.mxu0 0.0
        %1728 = vmatpush.msra.mxu0 0.0
        %1729 = vmatpush.msra.mxu0 0.0
        %1730 = vmatpush.msra.mxu0 0.0
        %1731 = vmatpush.msra.mxu0 0.0
        %1732 = vmatpush.msra.mxu0 0.0
        %1733 = vmatpush.msra.mxu0 0.0
        %1734 = vmatpush.msra.mxu0 0.0
        %1735 = vmatpush.msra.mxu0 0.0
        %1736 = vmatpush.msra.mxu0 %v1713
        %1737 = vmatpush.msra.mxu0 %v1712
        %1738 = vmatmul.f32.gmra.mxu0 %v1720
        %v1739 = vpop.f32.mrf.mxu0
        %v1740 = vadd.f32 0.0, %v1739
        %1741 = vdwg.mxu0
        %1742 = vmatpush.msra.mxu0 0.0
        %1743 = vmatpush.msra.mxu0 0.0
        %1744 = vmatpush.msra.mxu0 0.0
        %1745 = vmatpush.msra.mxu0 0.0
        %1746 = vmatpush.msra.mxu0 0.0
        %1747 = vmatpush.msra.mxu0 0.0
        %1748 = vmatpush.msra.mxu0 0.0
        %1749 = vmatpush.msra.mxu0 0.0
        %1750 = vmatpush.msra.mxu0 0.0
        %1751 = vmatpush.msra.mxu0 0.0
        %1752 = vmatpush.msra.mxu0 0.0
        %1753 = vmatpush.msra.mxu0 0.0
        %1754 = vmatpush.msra.mxu0 0.0
        %1755 = vmatpush.msra.mxu0 0.0
        %1756 = vmatpush.msra.mxu0 %v1717
        %1757 = vmatpush.msra.mxu0 %v1716
        %1758 = vmatmul.f32.gmra.mxu0 %v1720
        %v1759 = vpop.f32.mrf.mxu0
        %v1760 = vadd.f32 0.0, %v1759
        %1761 = vdwg.mxu0
        %v1762 = vperm.slane %v1714, 0
        %1763 = vmatpush.msra.mxu0 0.0
        %1764 = vmatpush.msra.mxu0 0.0
        %1765 = vmatpush.msra.mxu0 0.0
        %1766 = vmatpush.msra.mxu0 0.0
        %1767 = vmatpush.msra.mxu0 0.0
        %1768 = vmatpush.msra.mxu0 0.0
        %1769 = vmatpush.msra.mxu0 0.0
        %1770 = vmatpush.msra.mxu0 0.0
        %1771 = vmatpush.msra.mxu0 0.0
        %1772 = vmatpush.msra.mxu0 0.0
        %1773 = vmatpush.msra.mxu0 0.0
        %1774 = vmatpush.msra.mxu0 0.0
        %1775 = vmatpush.msra.mxu0 0.0
        %1776 = vmatpush.msra.mxu0 0.0
        %1777 = vmatpush.msra.mxu0 0.0
        %1778 = vmatpush.msra.mxu0 %v1740
        %1779 = vmatmul.f32.gmra.mxu0 %v1395
        %v1780 = vpop.f32.mrf.mxu0
        %v1781 = vadd.f32 %v1762, %v1780
        %1782 = vdwg.mxu0
        %v1783 = vperm.slane %v1718, 0
        %1784 = vmatpush.msra.mxu0 0.0
        %1785 = vmatpush.msra.mxu0 0.0
        %1786 = vmatpush.msra.mxu0 0.0
        %1787 = vmatpush.msra.mxu0 0.0
        %1788 = vmatpush.msra.mxu0 0.0
        %1789 = vmatpush.msra.mxu0 0.0
        %1790 = vmatpush.msra.mxu0 0.0
        %1791 = vmatpush.msra.mxu0 0.0
        %1792 = vmatpush.msra.mxu0 0.0
        %1793 = vmatpush.msra.mxu0 0.0
        %1794 = vmatpush.msra.mxu0 0.0
        %1795 = vmatpush.msra.mxu0 0.0
        %1796 = vmatpush.msra.mxu0 0.0
        %1797 = vmatpush.msra.mxu0 0.0
        %1798 = vmatpush.msra.mxu0 0.0
        %1799 = vmatpush.msra.mxu0 %v1760
        %1800 = vmatmul.f32.gmra.mxu0 %v1421
        %v1801 = vpop.f32.mrf.mxu0
        %v1802 = vadd.f32 %v1783, %v1801
        %1803 = vdwg.mxu0
        %v1804 = vxor.u32 %v1802, 2147483648
        %v1805 = vmul.f32 %v1804, 1.442695
        %v1806 = vpow.pop %v1805
        %v1807 = vadd.f32 %v1806, 1.0
        %v1808 = vrcp.pop %v1807
        %v1809 = vmul.f32 %v1807, %v1808
        %v1810 = vsub.f32 1.0, %v1809
        %v1811 = vmul.f32 %v1808, %v1810
        %v1812 = vadd.f32 %v1808, %v1811
        %vm1813 = vweird.f32 %v1807
        %vm1814 = vweird.f32 %v1808
        %vm1815 = vmor %vm1813, %vm1814
        %v1816 = vsel %vm1815, %v1808, %v1812
        %v1817 = vand.u32 2147483647, %v1807
        %vm1818 = vcmp.eq.f32.partialorder %v1817, 8.507059e+37
        %v1819 = vand.u32 %v1807, 2147483648
        %v1820 = vor.u32 1.1754944e-38, %v1819
        %v1821 = vsel %vm1818, %v1820, %v1816
        %v1822 = vmul.f32 1.0, %v1821
        %v1823 = vmul.f32 %v1822, 0.2
        %v1824 = vsub.f32 1.0, %v1823
        %v1825 = vmul.f32 %v1824, %v1781
        %v1826 = vmul.f32 %v1823, %v1802
        %v1827 = vadd.f32 %v1825, %v1826
        %v1829 = vsel %vm1473, %v1827, 0
        %1831 = vmatpush.msra.mxu0 0.0
        %1832 = vmatpush.msra.mxu0 0.0
        %1833 = vmatpush.msra.mxu0 0.0
        %1834 = vmatpush.msra.mxu0 0.0
        %1835 = vmatpush.msra.mxu0 0.0
        %1836 = vmatpush.msra.mxu0 0.0
        %1837 = vmatpush.msra.mxu0 0.0
        %1838 = vmatpush.msra.mxu0 0.0
        %1839 = vmatpush.msra.mxu0 0.0
        %1840 = vmatpush.msra.mxu0 0.0
        %1841 = vmatpush.msra.mxu0 0.0
        %1842 = vmatpush.msra.mxu0 0.0
        %1843 = vmatpush.msra.mxu0 0.0
        %1844 = vmatpush.msra.mxu0 0.0
        %1845 = vmatpush.msra.mxu0 %v1468
        %1846 = vmatpush.msra.mxu0 %v1467
        %1847 = vmatmul.f32.gmra.mxu0 %v1829
        %v1848 = vpop.f32.mrf.mxu0
        %v1849 = vadd.f32 %v1471, %v1848
        %1850 = vdwg.mxu0
        %v1851 = vmax.f32 %v1849, 0.0
        %v1852 = vxor.u32 %v1710, 2147483648
        %v1853 = vmul.f32 %v1852, 1.442695
        %v1854 = vpow.pop %v1853
        %v1855 = vadd.f32 %v1854, 1.0
        %v1856 = vrcp.pop %v1855
        %v1857 = vmul.f32 %v1855, %v1856
        %v1858 = vsub.f32 1.0, %v1857
        %v1859 = vmul.f32 %v1856, %v1858
        %v1860 = vadd.f32 %v1856, %v1859
        %vm1861 = vweird.f32 %v1855
        %vm1862 = vweird.f32 %v1856
        %vm1863 = vmor %vm1861, %vm1862
        %v1864 = vsel %vm1863, %v1856, %v1860
        %v1865 = vand.u32 2147483647, %v1855
        %vm1866 = vcmp.eq.f32.partialorder %v1865, 8.507059e+37
        %v1867 = vand.u32 %v1855, 2147483648
        %v1868 = vor.u32 1.1754944e-38, %v1867
        %v1869 = vsel %vm1866, %v1868, %v1864
        %v1870 = vmul.f32 1.0, %v1869
        %v1871 = vmul.f32 %v1870, %v1851
        %v1872 = vsub.f32 1.0, %v1870
        %v1873 = vmul.f32 %v1872, %v1710
        %v1874 = vadd.f32 %v1871, %v1873
        %v1875 = vld [vmem:[%s19] sm:$0xff]
        %v1876 = vld [vmem:[%s19 + $0x8] sm:$0xff]
        %v1877 = vld [vmem:[%s20] sm:$0x1]
        %v1879 = vperm.slane %v1877, 0
        %v1882 = vsel %vm1473, %v1874, 0
        %1884 = vmatpush.msra.mxu0 0.0
        %1885 = vmatpush.msra.mxu0 0.0
        %1886 = vmatpush.msra.mxu0 0.0
        %1887 = vmatpush.msra.mxu0 0.0
        %1888 = vmatpush.msra.mxu0 0.0
        %1889 = vmatpush.msra.mxu0 0.0
        %1890 = vmatpush.msra.mxu0 0.0
        %1891 = vmatpush.msra.mxu0 0.0
        %1892 = vmatpush.msra.mxu0 0.0
        %1893 = vmatpush.msra.mxu0 0.0
        %1894 = vmatpush.msra.mxu0 0.0
        %1895 = vmatpush.msra.mxu0 0.0
        %1896 = vmatpush.msra.mxu0 0.0
        %1897 = vmatpush.msra.mxu0 0.0
        %1898 = vmatpush.msra.mxu0 %v1876
        %1899 = vmatpush.msra.mxu0 %v1875
        %1900 = vmatmul.f32.gmra.mxu0 %v1882
        %v1901 = vpop.f32.mrf.mxu0
        %v1902 = vadd.f32 %v1879, %v1901
        %1903 = vdwg.mxu0
        %v1904 = vmin.f32 %v1902, 0.0
        %v1905 = vmul.f32 %v1904, 1.442695
        %v1906 = vpow.pop %v1905
        %v1907 = vsub.f32 %v1906, 1.0
        %vm1908 = vcmp.gt.f32.partialorder %v1902, 0.0
        %v1909 = vsel %vm1908, %v1902, %v1907
        %v1910 = vld [vmem:[%s21] sm:$0xff]
        %v1911 = vld [vmem:[%s21 + $0x8] sm:$0xff]
        %v1912 = vld [vmem:[%s21 + $0x10] sm:$0xff]
        %v1913 = vld [vmem:[%s21 + $0x18] sm:$0xff]
        %v1914 = vld [vmem:[%s21 + $0x20] sm:$0xff]
        %v1915 = vld [vmem:[%s21 + $0x28] sm:$0xff]
        %v1916 = vld [vmem:[%s21 + $0x30] sm:$0xff]
        %v1917 = vld [vmem:[%s21 + $0x38] sm:$0xff]
        %v1918 = vld [vmem:[%s21 + $0x40] sm:$0xff]
        %v1919 = vld [vmem:[%s21 + $0x48] sm:$0xff]
        %v1920 = vld [vmem:[%s21 + $0x50] sm:$0xff]
        %v1921 = vld [vmem:[%s21 + $0x58] sm:$0xff]
        %v1922 = vld [vmem:[%s21 + $0x60] sm:$0xff]
        %v1923 = vld [vmem:[%s21 + $0x68] sm:$0xff]
        %v1924 = vld [vmem:[%s21 + $0x70] sm:$0xff]
        %v1925 = vld [vmem:[%s21 + $0x78] sm:$0xff]
        %v1926 = vld [vmem:[%s22] sm:$0x1]
        %v1928 = vperm.slane %v1926, 0
        %1930 = vmatpush.msra.mxu0 %v1925
        %1931 = vmatpush.msra.mxu0 %v1924
        %1932 = vmatpush.msra.mxu0 %v1923
        %1933 = vmatpush.msra.mxu0 %v1922
        %1934 = vmatpush.msra.mxu0 %v1921
        %1935 = vmatpush.msra.mxu0 %v1920
        %1936 = vmatpush.msra.mxu0 %v1919
        %1937 = vmatpush.msra.mxu0 %v1918
        %1938 = vmatpush.msra.mxu0 %v1917
        %1939 = vmatpush.msra.mxu0 %v1916
        %1940 = vmatpush.msra.mxu0 %v1915
        %1941 = vmatpush.msra.mxu0 %v1914
        %1942 = vmatpush.msra.mxu0 %v1913
        %1943 = vmatpush.msra.mxu0 %v1912
        %1944 = vmatpush.msra.mxu0 %v1911
        %1945 = vmatpush.msra.mxu0 %v1910
        %1946 = vmatmul.f32.gmra.mxu0 %v1909
        %v1947 = vpop.f32.mrf.mxu0
        %v1948 = vadd.f32 %v1928, %v1947
        %1949 = vdwg.mxu0
        %1950 = vst.msk [vmem:[%s756] sm:$0xff] %vm1473, %v1948
        %v1951 = vld [vmem:[%s19] sm:$0xff]
        %v1952 = vld [vmem:[%s19 + $0x8] sm:$0xff]
        %v1953 = vld [vmem:[%s20] sm:$0x1]
        %v1955 = vperm.slane %v1953, 0
        %v1958 = vsel %vm1473, %v1781, 0
        %1960 = vmatpush.msra.mxu0 0.0
        %1961 = vmatpush.msra.mxu0 0.0
        %1962 = vmatpush.msra.mxu0 0.0
        %1963 = vmatpush.msra.mxu0 0.0
        %1964 = vmatpush.msra.mxu0 0.0
        %1965 = vmatpush.msra.mxu0 0.0
        %1966 = vmatpush.msra.mxu0 0.0
        %1967 = vmatpush.msra.mxu0 0.0
        %1968 = vmatpush.msra.mxu0 0.0
        %1969 = vmatpush.msra.mxu0 0.0
        %1970 = vmatpush.msra.mxu0 0.0
        %1971 = vmatpush.msra.mxu0 0.0
        %1972 = vmatpush.msra.mxu0 0.0
        %1973 = vmatpush.msra.mxu0 0.0
        %1974 = vmatpush.msra.mxu0 %v1952
        %1975 = vmatpush.msra.mxu0 %v1951
        %1976 = vmatmul.f32.gmra.mxu0 %v1958
        %v1977 = vpop.f32.mrf.mxu0
        %v1978 = vadd.f32 %v1955, %v1977
        %1979 = vdwg.mxu0
        %v1980 = vmin.f32 %v1978, 0.0
        %v1981 = vmul.f32 %v1980, 1.442695
        %v1982 = vpow.pop %v1981
        %v1983 = vsub.f32 %v1982, 1.0
        %vm1984 = vcmp.gt.f32.partialorder %v1978, 0.0
        %v1985 = vsel %vm1984, %v1978, %v1983
        %v1986 = vld [vmem:[%s21] sm:$0xff]
        %v1987 = vld [vmem:[%s21 + $0x8] sm:$0xff]
        %v1988 = vld [vmem:[%s21 + $0x10] sm:$0xff]
        %v1989 = vld [vmem:[%s21 + $0x18] sm:$0xff]
        %v1990 = vld [vmem:[%s21 + $0x20] sm:$0xff]
        %v1991 = vld [vmem:[%s21 + $0x28] sm:$0xff]
        %v1992 = vld [vmem:[%s21 + $0x30] sm:$0xff]
        %v1993 = vld [vmem:[%s21 + $0x38] sm:$0xff]
        %v1994 = vld [vmem:[%s21 + $0x40] sm:$0xff]
        %v1995 = vld [vmem:[%s21 + $0x48] sm:$0xff]
        %v1996 = vld [vmem:[%s21 + $0x50] sm:$0xff]
        %v1997 = vld [vmem:[%s21 + $0x58] sm:$0xff]
        %v1998 = vld [vmem:[%s21 + $0x60] sm:$0xff]
        %v1999 = vld [vmem:[%s21 + $0x68] sm:$0xff]
        %v2000 = vld [vmem:[%s21 + $0x70] sm:$0xff]
        %v2001 = vld [vmem:[%s21 + $0x78] sm:$0xff]
        %v2002 = vld [vmem:[%s22] sm:$0x1]
        %v2004 = vperm.slane %v2002, 0
        %2006 = vmatpush.msra.mxu0 %v2001
        %2007 = vmatpush.msra.mxu0 %v2000
        %2008 = vmatpush.msra.mxu0 %v1999
        %2009 = vmatpush.msra.mxu0 %v1998
        %2010 = vmatpush.msra.mxu0 %v1997
        %2011 = vmatpush.msra.mxu0 %v1996
        %2012 = vmatpush.msra.mxu0 %v1995
        %2013 = vmatpush.msra.mxu0 %v1994
        %2014 = vmatpush.msra.mxu0 %v1993
        %2015 = vmatpush.msra.mxu0 %v1992
        %2016 = vmatpush.msra.mxu0 %v1991
        %2017 = vmatpush.msra.mxu0 %v1990
        %2018 = vmatpush.msra.mxu0 %v1989
        %2019 = vmatpush.msra.mxu0 %v1988
        %2020 = vmatpush.msra.mxu0 %v1987
        %2021 = vmatpush.msra.mxu0 %v1986
        %2022 = vmatmul.f32.gmra.mxu0 %v1985
        %v2023 = vpop.f32.mrf.mxu0
        %v2024 = vadd.f32 %v2004, %v2023
        %2025 = vdwg.mxu0
        %2026 = vst.msk [vmem:[%s763] sm:$0xff] %vm1473, %v2024
        %s2027 = sand.u32 %s548, 1
        %s2028 = scalar_lea.sflag [#allocation3], %s2027
        %s2029 = sand.u32 %s548, 1
        %s2030 = smul.addr %s2029, 8
        %s2031 = scalar_lea.vmem [#allocation2], %s2030
        %s2032 = sand.u32 %s574, 1
        %s2033 = scalar_lea.sflag [#allocation5], %s2032
        %s2034 = sand.u32 %s574, 1
        %s2035 = smul.addr %s2034, 8
        %s2036 = scalar_lea.vmem [#allocation4], %s2035
        // Predicated region
        $region113: #{tpu_custom_call.1} parent=111 // pred_check
          %p2037 = pneg %p558
        $region114: #{tpu_custom_call.1} parent=111 // pred_check_branch
          %2039 = sbr.rel (%p2037) target = $region116
        $region115: #{tpu_custom_call.1} parent=111 // pred_region
          %2041 = vsyncadd %s2028, 0
          %s2042 = smul.addr %s42, 8
          %s2043 = scalar_lea.hbm %s23, %s2042
          %s2045 = sshll.u32 %s2031, 4
          %s2046 = int_to_ptr.vmem [resolvable:$true] %s2045
          %s2047 = sshll.u32 %s2043, 4
          %s2048 = int_to_ptr.hbm [resolvable:$true] %s2047
          %2050 = dma.vmem_to_hbm [thread:$0]  %s2046, 128, %s2048, %s2028
        $region116: #{tpu_custom_call.1} parent=111 // pred_fallthru
          _
        // Predicated region
        $region117: #{tpu_custom_call.1} parent=111 // pred_check
          %p2051 = pneg %p584
        $region118: #{tpu_custom_call.1} parent=111 // pred_check_branch
          %2053 = sbr.rel (%p2051) target = $region120
        $region119: #{tpu_custom_call.1} parent=111 // pred_region
          %2055 = vsyncadd %s2033, 0
          %s2056 = smul.addr %s42, 8
          %s2057 = scalar_lea.hbm %s24, %s2056
          %s2059 = sshll.u32 %s2036, 4
          %s2060 = int_to_ptr.vmem [resolvable:$true] %s2059
          %s2061 = sshll.u32 %s2057, 4
          %s2062 = int_to_ptr.hbm [resolvable:$true] %s2061
          %2064 = dma.vmem_to_hbm [thread:$0]  %s2060, 128, %s2062, %s2033
        $region120: #{tpu_custom_call.1} parent=111 // pred_fallthru
          _
      $region112: #{tpu_custom_call.1} parent=5 // pred_fallthru
        _
      %p2065 = scmp.le.s32.totalorder 2, %s37
      // Predicated region
      $region121: #{tpu_custom_call.1} parent=5 // pred_check
        %p2066 = pneg %p2065
      $region122: #{tpu_custom_call.1} parent=5 // pred_check_branch
        %2068 = sbr.rel (%p2066) target = $region124
      $region123: #{tpu_custom_call.1} parent=5 // pred_region
        %s2069 = ssub.s32 %s37, 2
        // Predicated region
        $region125: #{tpu_custom_call.1} parent=123 // pred_check
          %p2070 = pneg %p564
        $region126: #{tpu_custom_call.1} parent=123 // pred_check_branch
          %2072 = sbr.rel (%p2070) target = $region128
        $region127: #{tpu_custom_call.1} parent=123 // pred_region
          %s2073 = sand.u32 %s549, 1
          %s2074 = scalar_lea.sflag [#allocation3], %s2073
          %s2075 = sand.u32 %s549, 1
          %s2076 = smul.addr %s2075, 8
          %s2077 = scalar_lea.vmem [#allocation2], %s2076
          %2079 = dma.done %s2074, 128
        $region128: #{tpu_custom_call.1} parent=123 // pred_fallthru
          _
        // Predicated region
        $region129: #{tpu_custom_call.1} parent=123 // pred_check
          %p2080 = pneg %p590
        $region130: #{tpu_custom_call.1} parent=123 // pred_check_branch
          %2082 = sbr.rel (%p2080) target = $region132
        $region131: #{tpu_custom_call.1} parent=123 // pred_region
          %s2083 = sand.u32 %s575, 1
          %s2084 = scalar_lea.sflag [#allocation5], %s2083
          %s2085 = sand.u32 %s575, 1
          %s2086 = smul.addr %s2085, 8
          %s2087 = scalar_lea.vmem [#allocation4], %s2086
          %2089 = dma.done %s2084, 128
        $region132: #{tpu_custom_call.1} parent=123 // pred_fallthru
          _
      $region124: #{tpu_custom_call.1} parent=5 // pred_fallthru
        _
    $region6: #{tpu_custom_call.1} parent=1 // loop_footer
      %s41 = sadd.s32 1, %s37
    $region7: #{tpu_custom_call.1} parent=1 // loop_footer_branch
      %36 = sbr.rel target = $region3
    $region8: #{tpu_custom_call.1} parent=1 // loop_exit
      _
    %2090 = vsyncpa [#allocation3], 1
    %s2091 = scalar_lea.sflag [#allocation3], 1
    %2092 = vsyncpa %s2091, 1
    %2093 = vsyncpa [#allocation5], 1
    %s2094 = scalar_lea.sflag [#allocation5], 1
    %2095 = vsyncpa %s2094, 1

</llo_original>
